<compile_context>
chip_gen: v5e
topology: v5e:2x2
jax: 0.10.0
libtpu: 0.0.40
codegen_flags: <defaults>
</compile_context>

<pallas_src>
import math
from functools import partial

import jax
import jax.numpy as jnp
from jax.experimental import pallas as pl
from jax.experimental.pallas import tpu as pltpu


def _attention_kernel(q_ref, k_ref, v_ref,
                      wq_ref, bq_ref, wk_ref, bk_ref, wv_ref, bv_ref,
                      wo_ref, bo_ref,
                      o_ref,
                      *, nb_head):
    Bt, L, D = q_ref.shape
    _, S, _ = k_ref.shape
    H = nb_head
    P = wq_ref.shape[1]
    E = P // H

    # Collapse the batch-block into the row dim (leading-dim merge, no relayout)
    # and cast activations to bf16 for the MXU; accumulate in f32.
    q = q_ref[...].reshape(Bt * L, D).astype(jnp.bfloat16)
    k = k_ref[...].reshape(Bt * S, D).astype(jnp.bfloat16)
    v = v_ref[...].reshape(Bt * S, D).astype(jnp.bfloat16)

    # Full-width projections: one tall MXU matmul each (bf16 x bf16 -> f32).
    # The 1/sqrt(E) softmax scale is pre-folded into wq/bq by the wrapper.
    qp = jnp.dot(q, wq_ref[...], preferred_element_type=jnp.float32) + bq_ref[...]  # (Bt*L, P)
    kp = jnp.dot(k, wk_ref[...], preferred_element_type=jnp.float32) + bk_ref[...]  # (Bt*S, P)
    vp = jnp.dot(v, wv_ref[...], preferred_element_type=jnp.float32) + bv_ref[...]  # (Bt*S, P)

    qp = qp.reshape(Bt, L, H, E)
    kp = kp.reshape(Bt, S, H, E)
    vp = vp.reshape(Bt, S, H, E)

    # Attention is per batch element; Bt is small and static, so this Python
    # loop is fully unrolled at trace time.  Heads are batched inside a single
    # dot_general per direction (no per-head rank-E matmuls / lane-4 slices),
    # and the results stay in registers (no VMEM scratch round-trip).
    outs = []
    for b in range(Bt):
        qh = jnp.transpose(qp[b], (1, 0, 2)).astype(jnp.bfloat16)    # (H, L, E)
        kh = jnp.transpose(kp[b], (1, 0, 2)).astype(jnp.bfloat16)    # (H, S, E)
        vh = jnp.transpose(vp[b], (1, 0, 2)).astype(jnp.bfloat16)    # (H, S, E)

        s = jnp.einsum("hle,hse->hls", qh, kh,
                       preferred_element_type=jnp.float32)           # (H, L, S) f32
        m = jnp.max(s, axis=-1, keepdims=True)
        p = jnp.exp(s - m)
        inv = pl.reciprocal(jnp.sum(p, axis=-1, keepdims=True), approx=True)
        a = (p * inv).astype(jnp.bfloat16)                           # softmax rows
        av = jnp.einsum("hls,hse->hle", a, vh,
                        preferred_element_type=jnp.float32)          # (H, L, E) f32
        outs.append(jnp.transpose(av, (1, 0, 2)).reshape(L, P))      # (L, P)

    head_out = outs[0] if Bt == 1 else jnp.concatenate(outs, axis=0)  # (Bt*L, P)

    # Single output projection over the fused head dim; the output block is
    # written exactly once per grid step.
    out = (jnp.dot(head_out.astype(jnp.bfloat16), wo_ref[...],
                   preferred_element_type=jnp.float32) + bo_ref[...])  # (Bt*L, D)
    o_ref[...] = out.reshape(Bt, L, D)


def _pick_batch_block(B, L, target_rows=256):
    """Largest divisor Bt of B with Bt*L <= target_rows, while keeping >= 2
    grid steps along the batch axis when possible (so v7x's two TensorCores
    both get work under dimension_semantics=('parallel',))."""
    divisors = [d for d in range(1, B + 1) if B % d == 0]
    cands = sorted(d for d in divisors if d * L <= target_rows) or [1]
    bt = cands[-1]
    while bt > 1 and B // bt < 2:
        cands.pop()
        bt = cands[-1]
    return bt


def attention_forward(queries, keys, values, params, nb_head):
    """Pallas implementation of Attention.forward (get_attention=False, eval mode)."""
    B, L, D = queries.shape
    _, S, _ = keys.shape
    H = nb_head

    wq, bq = params["wq"], params["bq"]   # (D, P), (P,)
    wk, bk = params["wk"], params["bk"]
    wv, bv = params["wv"], params["bv"]
    wo, bo = params["wo"], params["bo"]   # (P, D), (D,)
    P = wq.shape[1]
    assert P % H == 0
    E = P // H
    scale = 1.0 / math.sqrt(float(E))

    # bf16 MXU weights (cast once here); biases stay f32 and are added to the
    # f32 accumulators.  Fold the 1/sqrt(E) softmax scale into the query
    # projection (constant parameter transform; zero per-step cost).
    wq_b = (wq * scale).astype(jnp.bfloat16)
    wk_b = wk.astype(jnp.bfloat16)
    wv_b = wv.astype(jnp.bfloat16)
    wo_b = wo.astype(jnp.bfloat16)
    bq2 = (bq * scale).reshape(1, P).astype(jnp.float32)
    bk2 = bk.reshape(1, P).astype(jnp.float32)
    bv2 = bv.reshape(1, P).astype(jnp.float32)
    bo2 = bo.reshape(1, D).astype(jnp.float32)

    Bt = _pick_batch_block(B, L)
    grid = (B // Bt,)

    in_specs = [
        pl.BlockSpec((Bt, L, D), lambda b: (b, 0, 0)),   # queries (Bt batches/step)
        pl.BlockSpec((Bt, S, D), lambda b: (b, 0, 0)),   # keys
        pl.BlockSpec((Bt, S, D), lambda b: (b, 0, 0)),   # values
        # Weights / biases: constant index_map -> DMA'd into VMEM once.
        # (Single-buffering these via pipeline_mode would save VMEM at large
        # D/P; negligible at these sizes so the default is kept.)
        pl.BlockSpec((D, P), lambda b: (0, 0)),          # wq (bf16, pre-scaled)
        pl.BlockSpec((1, P), lambda b: (0, 0)),          # bq (f32, pre-scaled)
        pl.BlockSpec((D, P), lambda b: (0, 0)),          # wk
        pl.BlockSpec((1, P), lambda b: (0, 0)),          # bk
        pl.BlockSpec((D, P), lambda b: (0, 0)),          # wv
        pl.BlockSpec((1, P), lambda b: (0, 0)),          # bv
        pl.BlockSpec((P, D), lambda b: (0, 0)),          # wo
        pl.BlockSpec((1, D), lambda b: (0, 0)),          # bo
    ]
    out_specs = pl.BlockSpec((Bt, L, D), lambda b: (b, 0, 0))

    # Advisory cost estimate so XLA schedules surrounding ops sensibly.
    flops = 2 * B * (L * D * P + 2 * S * D * P + 2 * H * L * S * E + L * P * D)
    transcendentals = B * H * L * S
    bytes_accessed = (B * (L + 2 * S) * D * 4 + B * L * D * 4
                      + (3 * D * P + P * D) * 2 + (3 * P + D) * 4)

    # Per-step VMEM budget: double-buffered activation blocks, (default
    # double-buffered) bf16 weights, biases, plus headroom for the transient
    # projection/score tiles.  Clamped to stay well inside v7x's 64 MiB part.
    block_bytes = (2 * Bt * (L + 2 * S) * D * 4          # q/k/v blocks (x2 buffers)
                   + 2 * Bt * L * D * 4                  # output block (x2 buffers)
                   + 2 * (3 * D * P + P * D) * 2         # bf16 weights (x2 buffers)
                   + 2 * (3 * P + D) * 4                 # biases
                   + 4 * (Bt * max(L, S) * P + H * L * S) * 4)
    vmem_limit = int(min(max(2 * block_bytes, 16 * 1024 * 1024), 32 * 1024 * 1024))

    out = pl.pallas_call(
        partial(_attention_kernel, nb_head=H),
        out_shape=jax.ShapeDtypeStruct((B, L, D), jnp.float32),
        grid=grid,
        in_specs=in_specs,
        out_specs=out_specs,
        compiler_params=pltpu.CompilerParams(
            dimension_semantics=("parallel",),
            vmem_limit_bytes=vmem_limit),
        cost_estimate=pl.CostEstimate(flops=flops,
                                      transcendentals=transcendentals,
                                      bytes_accessed=bytes_accessed),
    )(queries, keys, values, wq_b, bq2, wk_b, bk2, wv_b, bv2, wo_b, bo2)
    return out


def attention_reference(queries, keys, values, params, nb_head):
    """Pure-JAX (f32) reference mirroring the PyTorch forward (eval mode)."""
    B, L, D = queries.shape
    _, S, _ = keys.shape
    H = nb_head
    q = queries @ params["wq"] + params["bq"]
    k = keys @ params["wk"] + params["bk"]
    v = values @ params["wv"] + params["bv"]
    P = q.shape[-1]
    E = P // H
    q = q.reshape(B, L, H, E)
    k = k.reshape(B, S, H, E)
    v = v.reshape(B, S, H, E)
    scale = 1.0 / math.sqrt(float(E))
    scores = jnp.einsum("blhe,bshe->bhls", q, k)
    A = jax.nn.softmax(scale * scores, axis=-1)
    V = jnp.einsum("bhls,bshd->blhd", A, v)
    out = V.reshape(B, L, -1)
    return out @ params["wo"] + params["bo"]


def init_params(key, D, proj_dim):
    """Deterministic parameter init (uniform, like nn.Linear default bounds)."""
    ks = jax.random.split(key, 8)
    bnd_in = 1.0 / math.sqrt(D)
    bnd_proj = 1.0 / math.sqrt(proj_dim)
    u = lambda k, shape, b: jax.random.uniform(k, shape, jnp.float32, -b, b)
    return {
        "wq": u(ks[0], (D, proj_dim), bnd_in), "bq": u(ks[1], (proj_dim,), bnd_in),
        "wk": u(ks[2], (D, proj_dim), bnd_in), "bk": u(ks[3], (proj_dim,), bnd_in),
        "wv": u(ks[4], (D, proj_dim), bnd_in), "bv": u(ks[5], (proj_dim,), bnd_in),
        "wo": u(ks[6], (proj_dim, D), bnd_proj), "bo": u(ks[7], (D,), bnd_proj),
    }


if __name__ == "__main__":
    B, L, S, D, proj_dim, H = 2, 8, 8, 32, 32, 8   # E = proj_dim // H = 4

    key = jax.random.PRNGKey(0)
    kq, kk, kv, kparam = jax.random.split(key, 4)
    queries = jax.random.normal(kq, (B, L, D), jnp.float32)
    keys = jax.random.normal(kk, (B, S, D), jnp.float32)
    values = jax.random.normal(kv, (B, S, D), jnp.float32)
    params = init_params(kparam, D, proj_dim)

    out = attention_forward(queries, keys, values, params, H)
    out = jax.block_until_ready(out)

    ref = attention_reference(queries, keys, values, params, H)
    assert out.shape == (B, L, D)
    # bf16 MXU operands (f32 accumulation) + EUP approximate reciprocal in the
    # softmax denominator: compare against the full-f32 reference with a
    # few-percent tolerance.
    assert jnp.allclose(out, ref, atol=3e-2, rtol=3e-2), "mismatch vs. reference"

    print("KERNEL_OK")
</pallas_src>

<mosaic_0001>
module attributes {stable_mosaic.version = 11 : i64} {
  func.func @_attention_kernel(%arg0: i32, %arg1: memref<1x8x32xf32, #tpu.memory_space<vmem>>, %arg2: memref<1x8x32xf32, #tpu.memory_space<vmem>>, %arg3: memref<1x8x32xf32, #tpu.memory_space<vmem>>, %arg4: memref<32x32xbf16, #tpu.memory_space<vmem>>, %arg5: memref<1x32xf32, #tpu.memory_space<vmem>>, %arg6: memref<32x32xbf16, #tpu.memory_space<vmem>>, %arg7: memref<1x32xf32, #tpu.memory_space<vmem>>, %arg8: memref<32x32xbf16, #tpu.memory_space<vmem>>, %arg9: memref<1x32xf32, #tpu.memory_space<vmem>>, %arg10: memref<32x32xbf16, #tpu.memory_space<vmem>>, %arg11: memref<1x32xf32, #tpu.memory_space<vmem>>, %arg12: memref<1x8x32xf32, #tpu.memory_space<vmem>>) attributes {dimension_semantics = [#tpu.dimension_semantics<parallel>], iteration_bounds = array<i64: 2>, scalar_prefetch = 0 : i64, scratch_operands = 0 : i64, tpu.core_type = #tpu.core_type<tc>, window_params = [{transform_indices = @transform_0, window_bounds = array<i64: 1, 8, 32>}, {transform_indices = @transform_1, window_bounds = array<i64: 1, 8, 32>}, {transform_indices = @transform_2, window_bounds = array<i64: 1, 8, 32>}, {pipeline_mode = #tpu.pipeline_mode<synchronous>, transform_indices = @transform_3, window_bounds = array<i64: 32, 32>}, {pipeline_mode = #tpu.pipeline_mode<synchronous>, transform_indices = @transform_4, window_bounds = array<i64: 1, 32>}, {pipeline_mode = #tpu.pipeline_mode<synchronous>, transform_indices = @transform_5, window_bounds = array<i64: 32, 32>}, {pipeline_mode = #tpu.pipeline_mode<synchronous>, transform_indices = @transform_6, window_bounds = array<i64: 1, 32>}, {pipeline_mode = #tpu.pipeline_mode<synchronous>, transform_indices = @transform_7, window_bounds = array<i64: 32, 32>}, {pipeline_mode = #tpu.pipeline_mode<synchronous>, transform_indices = @transform_8, window_bounds = array<i64: 1, 32>}, {pipeline_mode = #tpu.pipeline_mode<synchronous>, transform_indices = @transform_9, window_bounds = array<i64: 32, 32>}, {pipeline_mode = #tpu.pipeline_mode<synchronous>, transform_indices = @transform_10, window_bounds = array<i64: 1, 32>}, {transform_indices = @transform_11, window_bounds = array<i64: 1, 8, 32>}]} {
    %c0 = arith.constant 0 : index
    %c0_0 = arith.constant 0 : index
    %c0_1 = arith.constant 0 : index
    %0 = vector.load %arg1[%c0, %c0_0, %c0_1] : memref<1x8x32xf32, #tpu.memory_space<vmem>>, vector<1x8x32xf32>
    %1 = vector.shape_cast %0 : vector<1x8x32xf32> to vector<8x32xf32>
    %2 = arith.truncf %1 : vector<8x32xf32> to vector<8x32xbf16>
    %c0_2 = arith.constant 0 : index
    %c0_3 = arith.constant 0 : index
    %c0_4 = arith.constant 0 : index
    %3 = vector.load %arg2[%c0_2, %c0_3, %c0_4] : memref<1x8x32xf32, #tpu.memory_space<vmem>>, vector<1x8x32xf32>
    %4 = vector.shape_cast %3 : vector<1x8x32xf32> to vector<8x32xf32>
    %5 = arith.truncf %4 : vector<8x32xf32> to vector<8x32xbf16>
    %c0_5 = arith.constant 0 : index
    %c0_6 = arith.constant 0 : index
    %c0_7 = arith.constant 0 : index
    %6 = vector.load %arg3[%c0_5, %c0_6, %c0_7] : memref<1x8x32xf32, #tpu.memory_space<vmem>>, vector<1x8x32xf32>
    %7 = vector.shape_cast %6 : vector<1x8x32xf32> to vector<8x32xf32>
    %8 = arith.truncf %7 : vector<8x32xf32> to vector<8x32xbf16>
    %c0_8 = arith.constant 0 : index
    %c0_9 = arith.constant 0 : index
    %9 = vector.load %arg4[%c0_8, %c0_9] : memref<32x32xbf16, #tpu.memory_space<vmem>>, vector<32x32xbf16>
    %cst = arith.constant dense<0.000000e+00> : vector<8x32xf32>
    %10 = tpu.matmul %2, %9, %cst {dimension_numbers = #tpu.dot_dimension_numbers<[1], [0], [0], [1], [0, 0, 1, 1], [], []>} : vector<8x32xbf16>, vector<32x32xbf16>, vector<8x32xf32> -> vector<8x32xf32>
    %c0_10 = arith.constant 0 : index
    %c0_11 = arith.constant 0 : index
    %11 = vector.load %arg5[%c0_10, %c0_11] : memref<1x32xf32, #tpu.memory_space<vmem>>, vector<1x32xf32>
    %12 = vector.broadcast %11 : vector<1x32xf32> to vector<8x32xf32>
    %13 = arith.addf %10, %12 : vector<8x32xf32>
    %c0_12 = arith.constant 0 : index
    %c0_13 = arith.constant 0 : index
    %14 = vector.load %arg6[%c0_12, %c0_13] : memref<32x32xbf16, #tpu.memory_space<vmem>>, vector<32x32xbf16>
    %cst_14 = arith.constant dense<0.000000e+00> : vector<8x32xf32>
    %15 = tpu.matmul %5, %14, %cst_14 {dimension_numbers = #tpu.dot_dimension_numbers<[1], [0], [0], [1], [0, 0, 1, 1], [], []>} : vector<8x32xbf16>, vector<32x32xbf16>, vector<8x32xf32> -> vector<8x32xf32>
    %c0_15 = arith.constant 0 : index
    %c0_16 = arith.constant 0 : index
    %16 = vector.load %arg7[%c0_15, %c0_16] : memref<1x32xf32, #tpu.memory_space<vmem>>, vector<1x32xf32>
    %17 = vector.broadcast %16 : vector<1x32xf32> to vector<8x32xf32>
    %18 = arith.addf %15, %17 : vector<8x32xf32>
    %c0_17 = arith.constant 0 : index
    %c0_18 = arith.constant 0 : index
    %19 = vector.load %arg8[%c0_17, %c0_18] : memref<32x32xbf16, #tpu.memory_space<vmem>>, vector<32x32xbf16>
    %cst_19 = arith.constant dense<0.000000e+00> : vector<8x32xf32>
    %20 = tpu.matmul %8, %19, %cst_19 {dimension_numbers = #tpu.dot_dimension_numbers<[1], [0], [0], [1], [0, 0, 1, 1], [], []>} : vector<8x32xbf16>, vector<32x32xbf16>, vector<8x32xf32> -> vector<8x32xf32>
    %c0_20 = arith.constant 0 : index
    %c0_21 = arith.constant 0 : index
    %21 = vector.load %arg9[%c0_20, %c0_21] : memref<1x32xf32, #tpu.memory_space<vmem>>, vector<1x32xf32>
    %22 = vector.broadcast %21 : vector<1x32xf32> to vector<8x32xf32>
    %23 = arith.addf %20, %22 : vector<8x32xf32>
    %24 = vector.shape_cast %13 : vector<8x32xf32> to vector<1x8x8x4xf32>
    %25 = vector.shape_cast %18 : vector<8x32xf32> to vector<1x8x8x4xf32>
    %26 = vector.shape_cast %23 : vector<8x32xf32> to vector<1x8x8x4xf32>
    %27 = vector.shape_cast %24 : vector<1x8x8x4xf32> to vector<8x8x4xf32>
    %28 = tpu.transpose %27, [1, 0, 2] : vector<8x8x4xf32> -> vector<8x8x4xf32>
    %29 = arith.truncf %28 : vector<8x8x4xf32> to vector<8x8x4xbf16>
    %30 = vector.shape_cast %25 : vector<1x8x8x4xf32> to vector<8x8x4xf32>
    %31 = tpu.transpose %30, [1, 0, 2] : vector<8x8x4xf32> -> vector<8x8x4xf32>
    %32 = arith.truncf %31 : vector<8x8x4xf32> to vector<8x8x4xbf16>
    %33 = vector.shape_cast %26 : vector<1x8x8x4xf32> to vector<8x8x4xf32>
    %34 = tpu.transpose %33, [1, 0, 2] : vector<8x8x4xf32> -> vector<8x8x4xf32>
    %35 = arith.truncf %34 : vector<8x8x4xf32> to vector<8x8x4xbf16>
    "tpu.trace_start"() <{level = 10 : i32, message = "hle,hse->hls"}> : () -> ()
    %cst_22 = arith.constant dense<0.000000e+00> : vector<8x8x8xf32>
    %36 = tpu.matmul %29, %32, %cst_22 {dimension_numbers = #tpu.dot_dimension_numbers<[2], [2], [1], [1], [0, 0, 0, 1, 1, 1], [0], [0]>} : vector<8x8x4xbf16>, vector<8x8x4xbf16>, vector<8x8x8xf32> -> vector<8x8x8xf32>
    "tpu.trace_stop"() : () -> ()
    %cst_23 = arith.constant dense<0xFF800000> : vector<8x8xf32>
    %37 = vector.multi_reduction <maximumf>, %36, %cst_23 [2] : vector<8x8x8xf32> to vector<8x8xf32>
    %38 = vector.shape_cast %37 : vector<8x8xf32> to vector<8x8x1xf32>
    %39 = vector.broadcast %38 : vector<8x8x1xf32> to vector<8x8x8xf32>
    %40 = arith.subf %36, %39 : vector<8x8x8xf32>
    %41 = math.exp %40 : vector<8x8x8xf32>
    %cst_24 = arith.constant dense<0.000000e+00> : vector<8x8xf32>
    %42 = vector.multi_reduction <add>, %41, %cst_24 [2] : vector<8x8x8xf32> to vector<8x8xf32>
    %43 = vector.shape_cast %42 : vector<8x8xf32> to vector<8x8x1xf32>
    %44 = tpu.reciprocal %43 {approx = true} : vector<8x8x1xf32> -> vector<8x8x1xf32>
    %45 = vector.broadcast %44 : vector<8x8x1xf32> to vector<8x8x8xf32>
    %46 = arith.mulf %41, %45 : vector<8x8x8xf32>
    %47 = arith.truncf %46 : vector<8x8x8xf32> to vector<8x8x8xbf16>
    "tpu.trace_start"() <{level = 10 : i32, message = "hls,hse->hle"}> : () -> ()
    %cst_25 = arith.constant dense<0.000000e+00> : vector<8x8x4xf32>
    %48 = tpu.matmul %47, %35, %cst_25 {dimension_numbers = #tpu.dot_dimension_numbers<[2], [1], [1], [2], [0, 0, 0, 1, 1, 2], [0], [0]>} : vector<8x8x8xbf16>, vector<8x8x4xbf16>, vector<8x8x4xf32> -> vector<8x8x4xf32>
    "tpu.trace_stop"() : () -> ()
    %49 = tpu.transpose %48, [1, 0, 2] : vector<8x8x4xf32> -> vector<8x8x4xf32>
    %50 = vector.shape_cast %49 : vector<8x8x4xf32> to vector<8x32xf32>
    %51 = arith.truncf %50 : vector<8x32xf32> to vector<8x32xbf16>
    %c0_26 = arith.constant 0 : index
    %c0_27 = arith.constant 0 : index
    %52 = vector.load %arg10[%c0_26, %c0_27] : memref<32x32xbf16, #tpu.memory_space<vmem>>, vector<32x32xbf16>
    %cst_28 = arith.constant dense<0.000000e+00> : vector<8x32xf32>
    %53 = tpu.matmul %51, %52, %cst_28 {dimension_numbers = #tpu.dot_dimension_numbers<[1], [0], [0], [1], [0, 0, 1, 1], [], []>} : vector<8x32xbf16>, vector<32x32xbf16>, vector<8x32xf32> -> vector<8x32xf32>
    %c0_29 = arith.constant 0 : index
    %c0_30 = arith.constant 0 : index
    %54 = vector.load %arg11[%c0_29, %c0_30] : memref<1x32xf32, #tpu.memory_space<vmem>>, vector<1x32xf32>
    %55 = vector.broadcast %54 : vector<1x32xf32> to vector<8x32xf32>
    %56 = arith.addf %53, %55 : vector<8x32xf32>
    %57 = vector.shape_cast %56 : vector<8x32xf32> to vector<1x8x32xf32>
    %c0_31 = arith.constant 0 : index
    %c0_32 = arith.constant 0 : index
    %c0_33 = arith.constant 0 : index
    %58 = vector.load %arg12[%c0_31, %c0_32, %c0_33] : memref<1x8x32xf32, #tpu.memory_space<vmem>>, vector<1x8x32xf32>
    tpu.vector_store %arg12[%c0_31, %c0_32, %c0_33], %57 {strides = array<i32>} : memref<1x8x32xf32, #tpu.memory_space<vmem>>, vector<1x8x32xf32>,
    return
  }
  func.func @transform_0(%arg0: i32) -> (i32, i32, i32) {
    %c0_i32 = arith.constant 0 : i32
    %c0_i32_0 = arith.constant 0 : i32
    %c0_i32_1 = arith.constant 0 : i32
    return %arg0, %c0_i32, %c0_i32_0 : i32, i32, i32
  }
  func.func @transform_1(%arg0: i32) -> (i32, i32, i32) {
    %c0_i32 = arith.constant 0 : i32
    %c0_i32_0 = arith.constant 0 : i32
    %c0_i32_1 = arith.constant 0 : i32
    return %arg0, %c0_i32, %c0_i32_0 : i32, i32, i32
  }
  func.func @transform_2(%arg0: i32) -> (i32, i32, i32) {
    %c0_i32 = arith.constant 0 : i32
    %c0_i32_0 = arith.constant 0 : i32
    %c0_i32_1 = arith.constant 0 : i32
    return %arg0, %c0_i32, %c0_i32_0 : i32, i32, i32
  }
  func.func @transform_3(%arg0: i32) -> (i32, i32) {
    %c0_i32 = arith.constant 0 : i32
    %c0_i32_0 = arith.constant 0 : i32
    %c0_i32_1 = arith.constant 0 : i32
    return %c0_i32, %c0_i32_0 : i32, i32
  }
  func.func @transform_4(%arg0: i32) -> (i32, i32) {
    %c0_i32 = arith.constant 0 : i32
    %c0_i32_0 = arith.constant 0 : i32
    %c0_i32_1 = arith.constant 0 : i32
    return %c0_i32, %c0_i32_0 : i32, i32
  }
  func.func @transform_5(%arg0: i32) -> (i32, i32) {
    %c0_i32 = arith.constant 0 : i32
    %c0_i32_0 = arith.constant 0 : i32
    %c0_i32_1 = arith.constant 0 : i32
    return %c0_i32, %c0_i32_0 : i32, i32
  }
  func.func @transform_6(%arg0: i32) -> (i32, i32) {
    %c0_i32 = arith.constant 0 : i32
    %c0_i32_0 = arith.constant 0 : i32
    %c0_i32_1 = arith.constant 0 : i32
    return %c0_i32, %c0_i32_0 : i32, i32
  }
  func.func @transform_7(%arg0: i32) -> (i32, i32) {
    %c0_i32 = arith.constant 0 : i32
    %c0_i32_0 = arith.constant 0 : i32
    %c0_i32_1 = arith.constant 0 : i32
    return %c0_i32, %c0_i32_0 : i32, i32
  }
  func.func @transform_8(%arg0: i32) -> (i32, i32) {
    %c0_i32 = arith.constant 0 : i32
    %c0_i32_0 = arith.constant 0 : i32
    %c0_i32_1 = arith.constant 0 : i32
    return %c0_i32, %c0_i32_0 : i32, i32
  }
  func.func @transform_9(%arg0: i32) -> (i32, i32) {
    %c0_i32 = arith.constant 0 : i32
    %c0_i32_0 = arith.constant 0 : i32
    %c0_i32_1 = arith.constant 0 : i32
    return %c0_i32, %c0_i32_0 : i32, i32
  }
  func.func @transform_10(%arg0: i32) -> (i32, i32) {
    %c0_i32 = arith.constant 0 : i32
    %c0_i32_0 = arith.constant 0 : i32
    %c0_i32_1 = arith.constant 0 : i32
    return %c0_i32, %c0_i32_0 : i32, i32
  }
  func.func @transform_11(%arg0: i32) -> (i32, i32, i32) {
    %c0_i32 = arith.constant 0 : i32
    %c0_i32_0 = arith.constant 0 : i32
    %c0_i32_1 = arith.constant 0 : i32
    return %arg0, %c0_i32, %c0_i32_0 : i32, i32, i32
  }
}

</mosaic_0001>

<llo_original>
// kernel: tpu_custom_call.1
$region0: #{tpu_custom_call.1}
  #allocation0 [shape = 'u32[]', space=smem, size = 0x4, offset = 0x4, fixed_abs, tag = 'smem constant byte address 0x4 - core index']
  #allocation1 [shape = 'u32[72,128]{1,0:T(1,128)}', space=vmem, size = 0x9000, scoped, tag = 'internal scratch']
  %s0 = inlined_call_operand.hbm [shape: f32[2,8,32], index: 0, kind: input, shape index: {}]
  %s1 = inlined_call_operand.hbm [shape: f32[2,8,32], index: 1, kind: input, shape index: {}]
  %s2 = inlined_call_operand.hbm [shape: f32[2,8,32], index: 2, kind: input, shape index: {}]
  %s3 = inlined_call_operand.hbm [shape: bf16[32,32], index: 3, kind: input, shape index: {}]
  %s4 = inlined_call_operand.vmem [shape: f32[1,32], index: 4, kind: input, shape index: {}]
  %s5 = inlined_call_operand.hbm [shape: bf16[32,32], index: 5, kind: input, shape index: {}]
  %s6 = inlined_call_operand.vmem [shape: f32[1,32], index: 6, kind: input, shape index: {}]
  %s7 = inlined_call_operand.hbm [shape: bf16[32,32], index: 7, kind: input, shape index: {}]
  %s8 = inlined_call_operand.vmem [shape: f32[1,32], index: 8, kind: input, shape index: {}]
  %s9 = inlined_call_operand.hbm [shape: bf16[32,32], index: 9, kind: input, shape index: {}]
  %s10 = inlined_call_operand.vmem [shape: f32[1,32], index: 10, kind: input, shape index: {}]
  %s11 = inlined_call_operand.hbm [shape: f32[2,8,32], index: 11, kind: output, shape index: {}]
  %s12 = sld [smem:[#allocation0]]
  $region105: #{tpu_custom_call.1} parent=0
    _
  %s14 = ssub.s32 1, %s12
  %s15 = scalar_select 0, %s14, %s12
  $region1: #{tpu_custom_call.1} parent=0
    #allocation2 [shape = 'u8[8192]{0}', space=vmem, size = 0x2000, scoped, tag = 'input window, operand 0']
    #allocation3 [shape = 's32[2]{0}', space=sflag, size = 0x8, scoped, tag = 'scoped memory for tpu_custom_call.1']
    #allocation4 [shape = 's32[2]{0}', space=sflag, size = 0x8, scoped, tag = 'scoped memory for tpu_custom_call.1']
    #allocation5 [shape = 'u8[8192]{0}', space=vmem, size = 0x2000, scoped, tag = 'input window, operand 1']
    #allocation6 [shape = 's32[2]{0}', space=sflag, size = 0x8, scoped, tag = 'scoped memory for tpu_custom_call.1']
    #allocation7 [shape = 'u8[8192]{0}', space=vmem, size = 0x2000, scoped, tag = 'input window, operand 2']
    #allocation8 [shape = 'u8[8192]{0}', space=vmem, size = 0x2000, scoped, tag = 'input window, operand 3, single buffered']
    #allocation9 [shape = 's32[1]{0}', space=sflag, size = 0x4, scoped, tag = 'scoped memory for tpu_custom_call.1']
    #allocation10 [shape = 'u8[8192]{0}', space=vmem, size = 0x2000, scoped, tag = 'input window, operand 5, single buffered']
    #allocation11 [shape = 'u8[8192]{0}', space=vmem, size = 0x2000, scoped, tag = 'input window, operand 7, single buffered']
    #allocation12 [shape = 's32[1]{0}', space=sflag, size = 0x4, scoped, tag = 'scoped memory for tpu_custom_call.1']
    #allocation13 [shape = 'u8[8192]{0}', space=vmem, size = 0x2000, scoped, tag = 'input window, operand 9, single buffered']
    #allocation14 [shape = 'u8[8192]{0}', space=vmem, size = 0x2000, scoped, tag = 'output window, operand 0']
    %16 = vsyncpa [#allocation3], 0
    %s17 = scalar_lea.sflag [#allocation3], 1
    %18 = vsyncpa %s17, 0
    %19 = vsyncpa [#allocation6], 0
    %s20 = scalar_lea.sflag [#allocation6], 1
    %21 = vsyncpa %s20, 0
    %22 = vsyncpa [#allocation9], 0
    %23 = vsyncpa [#allocation12], 0
    %24 = vsyncpa [#allocation4], 0
    %s25 = scalar_lea.sflag [#allocation4], 1
    %26 = vsyncpa %s25, 0
    loop: start=0, step=1, limit=4
    $region2: #{tpu_custom_call.1} parent=1 // loop_pre_header
      _
    $region3: #{tpu_custom_call.1} parent=1 // loop_header
      %s28 = sphi 0, %s32
      %p29 = scmp.ge.s32.totalorder %s28, 4
      %s38 = sphi 0, %s40
      %s41 = sphi 0, %s38
      %s42 = sphi 0, %s41
      %s58 = sphi 0, %s42
      %s64 = sphi 0, %s66
      %s67 = sphi 0, %s64
      %s68 = sphi 0, %s67
      %s84 = sphi 0, %s68
      %s90 = sphi 0, %s92
      %s93 = sphi 0, %s90
      %s94 = sphi 0, %s93
      %s110 = sphi 0, %s94
      %s114 = sphi 0, %s114
      %s116 = sphi 0, %s114
      %s117 = sphi 0, %s116
      %s131 = sphi 0, %s117
      %s135 = sphi 0, %s135
      %s137 = sphi 0, %s135
      %s138 = sphi 0, %s137
      %s152 = sphi 0, %s138
      %s156 = sphi 0, %s156
      %s158 = sphi 0, %s156
      %s159 = sphi 0, %s158
      %s173 = sphi 0, %s159
      %s177 = sphi 0, %s177
      %s179 = sphi 0, %s177
      %s180 = sphi 0, %s179
      %s194 = sphi 0, %s180
      %s198 = sphi 0, %s198
      %s200 = sphi 0, %s198
      %s201 = sphi 0, %s200
      %s215 = sphi 0, %s201
      %s219 = sphi 0, %s219
      %s221 = sphi 0, %s219
      %s222 = sphi 0, %s221
      %s236 = sphi 0, %s222
      %s240 = sphi 0, %s240
      %s242 = sphi 0, %s240
      %s243 = sphi 0, %s242
      %s257 = sphi 0, %s243
      %s261 = sphi 0, %s261
      %s263 = sphi 0, %s261
      %s264 = sphi 0, %s263
      %s278 = sphi 0, %s264
      %s284 = sphi 0, %s286
      %s287 = sphi 0, %s284
      %s288 = sphi 0, %s287
      %s304 = sphi 0, %s288
    $region4: #{tpu_custom_call.1} parent=1 // loop_header_branch
      %31 = sbr.rel (%p29) target = $region8
    $region5: #{tpu_custom_call.1} parent=1 // loop_body
      %s33 = ssub.s32 %s28, 1
      %s34 = ssub.s32 %s28, 2
      %s35 = sadd.s32 %s28, 1
      %s36 = ssub.s32 %s28, %s35
      %p37 = scmp.eq.s32.totalorder %s36, 0
      %s39 = sadd.s32 %s38, 1
      %s40 = scalar_select %p37, %s38, %s39
      %p43 = pneg %p37
      %p44 = scmp.eq.s32.totalorder %s28, 1
      %p45 = por %p43, %p44
      %p46 = scmp.ne.s32.totalorder %s38, %s41
      %p47 = scmp.eq.s32.totalorder %s28, 0
      %p48 = por %p46, %p47
      %p49 = scmp.ne.s32.totalorder %s38, %s41
      %p50 = scmp.eq.s32.totalorder %s33, 1
      %p51 = por %p49, %p50
      %p52 = scmp.ne.s32.totalorder %s41, %s42
      %p53 = scmp.eq.s32.totalorder %s33, 0
      %p54 = por %p52, %p53
      %p55 = scmp.ne.s32.totalorder %s41, %s42
      %p56 = scmp.eq.s32.totalorder %s34, 1
      %p57 = por %p55, %p56
      %p59 = scmp.ne.s32.totalorder %s42, %s58
      %p60 = scmp.eq.s32.totalorder %s34, 0
      %p61 = por %p59, %p60
      %s62 = ssub.s32 %s28, %s35
      %p63 = scmp.eq.s32.totalorder %s62, 0
      %s65 = sadd.s32 %s64, 1
      %s66 = scalar_select %p63, %s64, %s65
      %p69 = pneg %p63
      %p70 = scmp.eq.s32.totalorder %s28, 1
      %p71 = por %p69, %p70
      %p72 = scmp.ne.s32.totalorder %s64, %s67
      %p73 = scmp.eq.s32.totalorder %s28, 0
      %p74 = por %p72, %p73
      %p75 = scmp.ne.s32.totalorder %s64, %s67
      %p76 = scmp.eq.s32.totalorder %s33, 1
      %p77 = por %p75, %p76
      %p78 = scmp.ne.s32.totalorder %s67, %s68
      %p79 = scmp.eq.s32.totalorder %s33, 0
      %p80 = por %p78, %p79
      %p81 = scmp.ne.s32.totalorder %s67, %s68
      %p82 = scmp.eq.s32.totalorder %s34, 1
      %p83 = por %p81, %p82
      %p85 = scmp.ne.s32.totalorder %s68, %s84
      %p86 = scmp.eq.s32.totalorder %s34, 0
      %p87 = por %p85, %p86
      %s88 = ssub.s32 %s28, %s35
      %p89 = scmp.eq.s32.totalorder %s88, 0
      %s91 = sadd.s32 %s90, 1
      %s92 = scalar_select %p89, %s90, %s91
      %p95 = pneg %p89
      %p96 = scmp.eq.s32.totalorder %s28, 1
      %p97 = por %p95, %p96
      %p98 = scmp.ne.s32.totalorder %s90, %s93
      %p99 = scmp.eq.s32.totalorder %s28, 0
      %p100 = por %p98, %p99
      %p101 = scmp.ne.s32.totalorder %s90, %s93
      %p102 = scmp.eq.s32.totalorder %s33, 1
      %p103 = por %p101, %p102
      %p104 = scmp.ne.s32.totalorder %s93, %s94
      %p105 = scmp.eq.s32.totalorder %s33, 0
      %p106 = por %p104, %p105
      %p107 = scmp.ne.s32.totalorder %s93, %s94
      %p108 = scmp.eq.s32.totalorder %s34, 1
      %p109 = por %p107, %p108
      %p111 = scmp.ne.s32.totalorder %s94, %s110
      %p112 = scmp.eq.s32.totalorder %s34, 0
      %p113 = por %p111, %p112
      %s115 = sadd.s32 %s114, 1
      %p118 = scmp.eq.s32.totalorder %s28, 1
      %p119 = scmp.ne.s32.totalorder %s114, %s116
      %p120 = scmp.eq.s32.totalorder %s28, 0
      %p121 = por %p119, %p120
      %p122 = scmp.ne.s32.totalorder %s114, %s116
      %p123 = scmp.eq.s32.totalorder %s33, 1
      %p124 = por %p122, %p123
      %p125 = scmp.ne.s32.totalorder %s116, %s117
      %p126 = scmp.eq.s32.totalorder %s33, 0
      %p127 = por %p125, %p126
      %p128 = scmp.ne.s32.totalorder %s116, %s117
      %p129 = scmp.eq.s32.totalorder %s34, 1
      %p130 = por %p128, %p129
      %p132 = scmp.ne.s32.totalorder %s117, %s131
      %p133 = scmp.eq.s32.totalorder %s34, 0
      %p134 = por %p132, %p133
      %s136 = sadd.s32 %s135, 1
      %p139 = scmp.eq.s32.totalorder %s28, 1
      %p140 = scmp.ne.s32.totalorder %s135, %s137
      %p141 = scmp.eq.s32.totalorder %s28, 0
      %p142 = por %p140, %p141
      %p143 = scmp.ne.s32.totalorder %s135, %s137
      %p144 = scmp.eq.s32.totalorder %s33, 1
      %p145 = por %p143, %p144
      %p146 = scmp.ne.s32.totalorder %s137, %s138
      %p147 = scmp.eq.s32.totalorder %s33, 0
      %p148 = por %p146, %p147
      %p149 = scmp.ne.s32.totalorder %s137, %s138
      %p150 = scmp.eq.s32.totalorder %s34, 1
      %p151 = por %p149, %p150
      %p153 = scmp.ne.s32.totalorder %s138, %s152
      %p154 = scmp.eq.s32.totalorder %s34, 0
      %p155 = por %p153, %p154
      %s157 = sadd.s32 %s156, 1
      %p160 = scmp.eq.s32.totalorder %s28, 1
      %p161 = scmp.ne.s32.totalorder %s156, %s158
      %p162 = scmp.eq.s32.totalorder %s28, 0
      %p163 = por %p161, %p162
      %p164 = scmp.ne.s32.totalorder %s156, %s158
      %p165 = scmp.eq.s32.totalorder %s33, 1
      %p166 = por %p164, %p165
      %p167 = scmp.ne.s32.totalorder %s158, %s159
      %p168 = scmp.eq.s32.totalorder %s33, 0
      %p169 = por %p167, %p168
      %p170 = scmp.ne.s32.totalorder %s158, %s159
      %p171 = scmp.eq.s32.totalorder %s34, 1
      %p172 = por %p170, %p171
      %p174 = scmp.ne.s32.totalorder %s159, %s173
      %p175 = scmp.eq.s32.totalorder %s34, 0
      %p176 = por %p174, %p175
      %s178 = sadd.s32 %s177, 1
      %p181 = scmp.eq.s32.totalorder %s28, 1
      %p182 = scmp.ne.s32.totalorder %s177, %s179
      %p183 = scmp.eq.s32.totalorder %s28, 0
      %p184 = por %p182, %p183
      %p185 = scmp.ne.s32.totalorder %s177, %s179
      %p186 = scmp.eq.s32.totalorder %s33, 1
      %p187 = por %p185, %p186
      %p188 = scmp.ne.s32.totalorder %s179, %s180
      %p189 = scmp.eq.s32.totalorder %s33, 0
      %p190 = por %p188, %p189
      %p191 = scmp.ne.s32.totalorder %s179, %s180
      %p192 = scmp.eq.s32.totalorder %s34, 1
      %p193 = por %p191, %p192
      %p195 = scmp.ne.s32.totalorder %s180, %s194
      %p196 = scmp.eq.s32.totalorder %s34, 0
      %p197 = por %p195, %p196
      %s199 = sadd.s32 %s198, 1
      %p202 = scmp.eq.s32.totalorder %s28, 1
      %p203 = scmp.ne.s32.totalorder %s198, %s200
      %p204 = scmp.eq.s32.totalorder %s28, 0
      %p205 = por %p203, %p204
      %p206 = scmp.ne.s32.totalorder %s198, %s200
      %p207 = scmp.eq.s32.totalorder %s33, 1
      %p208 = por %p206, %p207
      %p209 = scmp.ne.s32.totalorder %s200, %s201
      %p210 = scmp.eq.s32.totalorder %s33, 0
      %p211 = por %p209, %p210
      %p212 = scmp.ne.s32.totalorder %s200, %s201
      %p213 = scmp.eq.s32.totalorder %s34, 1
      %p214 = por %p212, %p213
      %p216 = scmp.ne.s32.totalorder %s201, %s215
      %p217 = scmp.eq.s32.totalorder %s34, 0
      %p218 = por %p216, %p217
      %s220 = sadd.s32 %s219, 1
      %p223 = scmp.eq.s32.totalorder %s28, 1
      %p224 = scmp.ne.s32.totalorder %s219, %s221
      %p225 = scmp.eq.s32.totalorder %s28, 0
      %p226 = por %p224, %p225
      %p227 = scmp.ne.s32.totalorder %s219, %s221
      %p228 = scmp.eq.s32.totalorder %s33, 1
      %p229 = por %p227, %p228
      %p230 = scmp.ne.s32.totalorder %s221, %s222
      %p231 = scmp.eq.s32.totalorder %s33, 0
      %p232 = por %p230, %p231
      %p233 = scmp.ne.s32.totalorder %s221, %s222
      %p234 = scmp.eq.s32.totalorder %s34, 1
      %p235 = por %p233, %p234
      %p237 = scmp.ne.s32.totalorder %s222, %s236
      %p238 = scmp.eq.s32.totalorder %s34, 0
      %p239 = por %p237, %p238
      %s241 = sadd.s32 %s240, 1
      %p244 = scmp.eq.s32.totalorder %s28, 1
      %p245 = scmp.ne.s32.totalorder %s240, %s242
      %p246 = scmp.eq.s32.totalorder %s28, 0
      %p247 = por %p245, %p246
      %p248 = scmp.ne.s32.totalorder %s240, %s242
      %p249 = scmp.eq.s32.totalorder %s33, 1
      %p250 = por %p248, %p249
      %p251 = scmp.ne.s32.totalorder %s242, %s243
      %p252 = scmp.eq.s32.totalorder %s33, 0
      %p253 = por %p251, %p252
      %p254 = scmp.ne.s32.totalorder %s242, %s243
      %p255 = scmp.eq.s32.totalorder %s34, 1
      %p256 = por %p254, %p255
      %p258 = scmp.ne.s32.totalorder %s243, %s257
      %p259 = scmp.eq.s32.totalorder %s34, 0
      %p260 = por %p258, %p259
      %s262 = sadd.s32 %s261, 1
      %p265 = scmp.eq.s32.totalorder %s28, 1
      %p266 = scmp.ne.s32.totalorder %s261, %s263
      %p267 = scmp.eq.s32.totalorder %s28, 0
      %p268 = por %p266, %p267
      %p269 = scmp.ne.s32.totalorder %s261, %s263
      %p270 = scmp.eq.s32.totalorder %s33, 1
      %p271 = por %p269, %p270
      %p272 = scmp.ne.s32.totalorder %s263, %s264
      %p273 = scmp.eq.s32.totalorder %s33, 0
      %p274 = por %p272, %p273
      %p275 = scmp.ne.s32.totalorder %s263, %s264
      %p276 = scmp.eq.s32.totalorder %s34, 1
      %p277 = por %p275, %p276
      %p279 = scmp.ne.s32.totalorder %s264, %s278
      %p280 = scmp.eq.s32.totalorder %s34, 0
      %p281 = por %p279, %p280
      %s282 = ssub.s32 %s28, %s35
      %p283 = scmp.eq.s32.totalorder %s282, 0
      %s285 = sadd.s32 %s284, 1
      %s286 = scalar_select %p283, %s284, %s285
      %p289 = pneg %p283
      %p290 = scmp.eq.s32.totalorder %s28, 1
      %p291 = por %p289, %p290
      %p292 = scmp.ne.s32.totalorder %s284, %s287
      %p293 = scmp.eq.s32.totalorder %s28, 0
      %p294 = por %p292, %p293
      %p295 = scmp.ne.s32.totalorder %s284, %s287
      %p296 = scmp.eq.s32.totalorder %s33, 1
      %p297 = por %p295, %p296
      %p298 = scmp.ne.s32.totalorder %s287, %s288
      %p299 = scmp.eq.s32.totalorder %s33, 0
      %p300 = por %p298, %p299
      %p301 = scmp.ne.s32.totalorder %s287, %s288
      %p302 = scmp.eq.s32.totalorder %s34, 1
      %p303 = por %p301, %p302
      %p305 = scmp.ne.s32.totalorder %s288, %s304
      %p306 = scmp.eq.s32.totalorder %s34, 0
      %p307 = por %p305, %p306
      %p308 = scmp.le.s32.totalorder 1, %s28
      %p309 = scmp.lt.s32.totalorder %s28, 3
      %p310 = pnand %p308, %p309
      %p311 = pneg %p310
      // Predicated region
      $region9: #{tpu_custom_call.1} parent=5 // pred_check
        _
      $region10: #{tpu_custom_call.1} parent=5 // pred_check_branch
        %313 = sbr.rel (%p310) target = $region12
      $region11: #{tpu_custom_call.1} parent=5 // pred_region
        %s314 = ssub.s32 %s28, 1
        // Predicated region
        $region13: #{tpu_custom_call.1} parent=11 // pred_check
          %p315 = pneg %p127
        $region14: #{tpu_custom_call.1} parent=11 // pred_check_branch
          %317 = sbr.rel (%p315) target = $region16
        $region15: #{tpu_custom_call.1} parent=11 // pred_region
          %319 = vsyncadd [#allocation9], 0
          %s320 = sshll.u32 %s3, 4
          %s321 = int_to_ptr.hbm [resolvable:$true] %s320
          %s322 = sshll.u32 [#allocation8], 4
          %s323 = int_to_ptr.vmem [resolvable:$true] %s322
          %328 = dma.hbm_to_vmem [thread:$0]  %s321, 256, %s323, [#allocation9], 64, 64, 4
        $region16: #{tpu_custom_call.1} parent=11 // pred_fallthru
          _
        // Predicated region
        $region17: #{tpu_custom_call.1} parent=11 // pred_check
          %p329 = pneg %p148
        $region18: #{tpu_custom_call.1} parent=11 // pred_check_branch
          %331 = sbr.rel (%p329) target = $region20
        $region19: #{tpu_custom_call.1} parent=11 // pred_region
          _
        $region20: #{tpu_custom_call.1} parent=11 // pred_fallthru
          _
        // Predicated region
        $region21: #{tpu_custom_call.1} parent=11 // pred_check
          %p332 = pneg %p169
        $region22: #{tpu_custom_call.1} parent=11 // pred_check_branch
          %334 = sbr.rel (%p332) target = $region24
        $region23: #{tpu_custom_call.1} parent=11 // pred_region
          %336 = vsyncadd [#allocation9], 0
          %s337 = sshll.u32 %s5, 4
          %s338 = int_to_ptr.hbm [resolvable:$true] %s337
          %s339 = sshll.u32 [#allocation10], 4
          %s340 = int_to_ptr.vmem [resolvable:$true] %s339
          %345 = dma.hbm_to_vmem [thread:$0]  %s338, 256, %s340, [#allocation9], 64, 64, 4
        $region24: #{tpu_custom_call.1} parent=11 // pred_fallthru
          _
        // Predicated region
        $region25: #{tpu_custom_call.1} parent=11 // pred_check
          %p346 = pneg %p190
        $region26: #{tpu_custom_call.1} parent=11 // pred_check_branch
          %348 = sbr.rel (%p346) target = $region28
        $region27: #{tpu_custom_call.1} parent=11 // pred_region
          _
        $region28: #{tpu_custom_call.1} parent=11 // pred_fallthru
          _
        // Predicated region
        $region29: #{tpu_custom_call.1} parent=11 // pred_check
          %p349 = pneg %p211
        $region30: #{tpu_custom_call.1} parent=11 // pred_check_branch
          %351 = sbr.rel (%p349) target = $region32
        $region31: #{tpu_custom_call.1} parent=11 // pred_region
          %353 = vsyncadd [#allocation12], 0
          %s354 = sshll.u32 %s7, 4
          %s355 = int_to_ptr.hbm [resolvable:$true] %s354
          %s356 = sshll.u32 [#allocation11], 4
          %s357 = int_to_ptr.vmem [resolvable:$true] %s356
          %362 = dma.hbm_to_vmem [thread:$0]  %s355, 256, %s357, [#allocation12], 64, 64, 4
        $region32: #{tpu_custom_call.1} parent=11 // pred_fallthru
          _
        // Predicated region
        $region33: #{tpu_custom_call.1} parent=11 // pred_check
          %p363 = pneg %p232
        $region34: #{tpu_custom_call.1} parent=11 // pred_check_branch
          %365 = sbr.rel (%p363) target = $region36
        $region35: #{tpu_custom_call.1} parent=11 // pred_region
          _
        $region36: #{tpu_custom_call.1} parent=11 // pred_fallthru
          _
        // Predicated region
        $region37: #{tpu_custom_call.1} parent=11 // pred_check
          %p366 = pneg %p253
        $region38: #{tpu_custom_call.1} parent=11 // pred_check_branch
          %368 = sbr.rel (%p366) target = $region40
        $region39: #{tpu_custom_call.1} parent=11 // pred_region
          %370 = vsyncadd [#allocation12], 0
          %s371 = sshll.u32 %s9, 4
          %s372 = int_to_ptr.hbm [resolvable:$true] %s371
          %s373 = sshll.u32 [#allocation13], 4
          %s374 = int_to_ptr.vmem [resolvable:$true] %s373
          %379 = dma.hbm_to_vmem [thread:$0]  %s372, 256, %s374, [#allocation12], 64, 64, 4
        $region40: #{tpu_custom_call.1} parent=11 // pred_fallthru
          _
        // Predicated region
        $region41: #{tpu_custom_call.1} parent=11 // pred_check
          %p380 = pneg %p274
        $region42: #{tpu_custom_call.1} parent=11 // pred_check_branch
          %382 = sbr.rel (%p380) target = $region44
        $region43: #{tpu_custom_call.1} parent=11 // pred_region
          _
        $region44: #{tpu_custom_call.1} parent=11 // pred_fallthru
          _
      $region12: #{tpu_custom_call.1} parent=5 // pred_fallthru
        _
      %p383 = scmp.lt.s32.totalorder %s28, 2
      // Predicated region
      $region45: #{tpu_custom_call.1} parent=5 // pred_check
        %p384 = pneg %p383
      $region46: #{tpu_custom_call.1} parent=5 // pred_check_branch
        %386 = sbr.rel (%p384) target = $region48
      $region47: #{tpu_custom_call.1} parent=5 // pred_region
        // Predicated region
        $region49: #{tpu_custom_call.1} parent=47 // pred_check
          %p387 = pneg %p48
        $region50: #{tpu_custom_call.1} parent=47 // pred_check_branch
          %389 = sbr.rel (%p387) target = $region52
        $region51: #{tpu_custom_call.1} parent=47 // pred_region
          %s390 = sand.u32 %s38, 1
          %s391 = scalar_lea.sflag [#allocation3], %s390
          %s392 = sand.u32 %s38, 1
          %s393 = smul.addr %s392, 8
          %s394 = scalar_lea.vmem [#allocation2], %s393
          %396 = vsyncadd %s391, 0
          %s397 = smul.addr %s28, 8
          %s398 = scalar_lea.hbm %s0, %s397
          %s400 = sshll.u32 %s398, 4
          %s401 = int_to_ptr.hbm [resolvable:$true] %s400
          %s402 = sshll.u32 %s394, 4
          %s403 = int_to_ptr.vmem [resolvable:$true] %s402
          %405 = dma.hbm_to_vmem [thread:$0]  %s401, 128, %s403, %s391
        $region52: #{tpu_custom_call.1} parent=47 // pred_fallthru
          _
        // Predicated region
        $region53: #{tpu_custom_call.1} parent=47 // pred_check
          %p406 = pneg %p74
        $region54: #{tpu_custom_call.1} parent=47 // pred_check_branch
          %408 = sbr.rel (%p406) target = $region56
        $region55: #{tpu_custom_call.1} parent=47 // pred_region
          %s409 = sand.u32 %s28, 1
          %s410 = scalar_lea.sflag [#allocation6], %s409
          %s411 = sand.u32 %s64, 1
          %s412 = smul.addr %s411, 8
          %s413 = scalar_lea.vmem [#allocation5], %s412
          %415 = vsyncadd %s410, 0
          %s416 = smul.addr %s28, 8
          %s417 = scalar_lea.hbm %s1, %s416
          %s419 = sshll.u32 %s417, 4
          %s420 = int_to_ptr.hbm [resolvable:$true] %s419
          %s421 = sshll.u32 %s413, 4
          %s422 = int_to_ptr.vmem [resolvable:$true] %s421
          %424 = dma.hbm_to_vmem [thread:$0]  %s420, 128, %s422, %s410
        $region56: #{tpu_custom_call.1} parent=47 // pred_fallthru
          _
        // Predicated region
        $region57: #{tpu_custom_call.1} parent=47 // pred_check
          %p425 = pneg %p100
        $region58: #{tpu_custom_call.1} parent=47 // pred_check_branch
          %427 = sbr.rel (%p425) target = $region60
        $region59: #{tpu_custom_call.1} parent=47 // pred_region
          %s428 = sand.u32 %s28, 1
          %s429 = scalar_lea.sflag [#allocation6], %s428
          %s430 = sand.u32 %s90, 1
          %s431 = smul.addr %s430, 8
          %s432 = scalar_lea.vmem [#allocation7], %s431
          %434 = vsyncadd %s429, 0
          %s435 = smul.addr %s28, 8
          %s436 = scalar_lea.hbm %s2, %s435
          %s438 = sshll.u32 %s436, 4
          %s439 = int_to_ptr.hbm [resolvable:$true] %s438
          %s440 = sshll.u32 %s432, 4
          %s441 = int_to_ptr.vmem [resolvable:$true] %s440
          %443 = dma.hbm_to_vmem [thread:$0]  %s439, 128, %s441, %s429
        $region60: #{tpu_custom_call.1} parent=47 // pred_fallthru
          _
      $region48: #{tpu_custom_call.1} parent=5 // pred_fallthru
        _
      %p444 = scmp.le.s32.totalorder 1, %s28
      %p445 = scmp.lt.s32.totalorder %s28, 3
      %p446 = pnand %p444, %p445
      %p447 = pneg %p446
      // Predicated region
      $region61: #{tpu_custom_call.1} parent=5 // pred_check
        _
      $region62: #{tpu_custom_call.1} parent=5 // pred_check_branch
        %449 = sbr.rel (%p446) target = $region64
      $region63: #{tpu_custom_call.1} parent=5 // pred_region
        %s450 = ssub.s32 %s28, 1
        %s451 = sand.u32 %s41, 1
        %s452 = scalar_lea.sflag [#allocation3], %s451
        %s453 = sand.u32 %s41, 1
        %s454 = smul.addr %s453, 8
        %s455 = scalar_lea.vmem [#allocation2], %s454
        // Predicated region
        $region65: #{tpu_custom_call.1} parent=63 // pred_check
          %p456 = pneg %p54
        $region66: #{tpu_custom_call.1} parent=63 // pred_check_branch
          %458 = sbr.rel (%p456) target = $region68
        $region67: #{tpu_custom_call.1} parent=63 // pred_region
          %460 = dma.done %s452, 128
        $region68: #{tpu_custom_call.1} parent=63 // pred_fallthru
          _
        %s461 = sand.u32 %s33, 1
        %s462 = scalar_lea.sflag [#allocation6], %s461
        %s463 = sand.u32 %s67, 1
        %s464 = smul.addr %s463, 8
        %s465 = scalar_lea.vmem [#allocation5], %s464
        // Predicated region
        $region69: #{tpu_custom_call.1} parent=63 // pred_check
          %p466 = pneg %p80
        $region70: #{tpu_custom_call.1} parent=63 // pred_check_branch
          %468 = sbr.rel (%p466) target = $region72
        $region71: #{tpu_custom_call.1} parent=63 // pred_region
          %470 = dma.done %s462, 128
        $region72: #{tpu_custom_call.1} parent=63 // pred_fallthru
          _
        %s471 = sand.u32 %s33, 1
        %s472 = scalar_lea.sflag [#allocation6], %s471
        %s473 = sand.u32 %s93, 1
        %s474 = smul.addr %s473, 8
        %s475 = scalar_lea.vmem [#allocation7], %s474
        // Predicated region
        $region73: #{tpu_custom_call.1} parent=63 // pred_check
          %p476 = pneg %p106
        $region74: #{tpu_custom_call.1} parent=63 // pred_check_branch
          %478 = sbr.rel (%p476) target = $region76
        $region75: #{tpu_custom_call.1} parent=63 // pred_region
          %480 = dma.done %s472, 128
        $region76: #{tpu_custom_call.1} parent=63 // pred_fallthru
          _
        // Predicated region
        $region77: #{tpu_custom_call.1} parent=63 // pred_check
          %p481 = pneg %p127
        $region78: #{tpu_custom_call.1} parent=63 // pred_check_branch
          %483 = sbr.rel (%p481) target = $region80
        $region79: #{tpu_custom_call.1} parent=63 // pred_region
          %485 = dma.done [#allocation9], 256
        $region80: #{tpu_custom_call.1} parent=63 // pred_fallthru
          _
        // Predicated region
        $region81: #{tpu_custom_call.1} parent=63 // pred_check
          %p486 = pneg %p169
        $region82: #{tpu_custom_call.1} parent=63 // pred_check_branch
          %488 = sbr.rel (%p486) target = $region84
        $region83: #{tpu_custom_call.1} parent=63 // pred_region
          %490 = dma.done [#allocation9], 256
        $region84: #{tpu_custom_call.1} parent=63 // pred_fallthru
          _
        // Predicated region
        $region85: #{tpu_custom_call.1} parent=63 // pred_check
          %p491 = pneg %p211
        $region86: #{tpu_custom_call.1} parent=63 // pred_check_branch
          %493 = sbr.rel (%p491) target = $region88
        $region87: #{tpu_custom_call.1} parent=63 // pred_region
          %495 = dma.done [#allocation12], 256
        $region88: #{tpu_custom_call.1} parent=63 // pred_fallthru
          _
        // Predicated region
        $region89: #{tpu_custom_call.1} parent=63 // pred_check
          %p496 = pneg %p253
        $region90: #{tpu_custom_call.1} parent=63 // pred_check_branch
          %498 = sbr.rel (%p496) target = $region92
        $region91: #{tpu_custom_call.1} parent=63 // pred_region
          %500 = dma.done [#allocation12], 256
        $region92: #{tpu_custom_call.1} parent=63 // pred_fallthru
          _
        %s501 = sand.u32 %s41, 1
        %s502 = scalar_lea.sflag [#allocation3], %s501
        %s503 = sand.u32 %s41, 1
        %s504 = smul.addr %s503, 8
        %s505 = scalar_lea.vmem [#allocation2], %s504
        %p506 = pneg %p54
        %p507 = pneg %p51
        %s508 = sand.u32 %s33, 1
        %s509 = scalar_lea.sflag [#allocation6], %s508
        %s510 = sand.u32 %s67, 1
        %s511 = smul.addr %s510, 8
        %s512 = scalar_lea.vmem [#allocation5], %s511
        %p513 = pneg %p80
        %p514 = pneg %p77
        %s515 = sand.u32 %s33, 1
        %s516 = scalar_lea.sflag [#allocation6], %s515
        %s517 = sand.u32 %s93, 1
        %s518 = smul.addr %s517, 8
        %s519 = scalar_lea.vmem [#allocation7], %s518
        %p520 = pneg %p106
        %p521 = pneg %p103
        %p522 = pneg %p127
        %p523 = pneg %p124
        %p524 = pneg %p148
        %p525 = pneg %p145
        %p526 = pneg %p169
        %p527 = pneg %p166
        %p528 = pneg %p190
        %p529 = pneg %p187
        %p530 = pneg %p211
        %p531 = pneg %p208
        %p532 = pneg %p232
        %p533 = pneg %p229
        %p534 = pneg %p253
        %p535 = pneg %p250
        %p536 = pneg %p274
        %p537 = pneg %p271
        %p538 = pneg %p300
        %p539 = pneg %p297
        %s540 = sand.u32 %s287, 1
        %s541 = scalar_lea.sflag [#allocation4], %s540
        %s542 = sand.u32 %s287, 1
        %s543 = smul.addr %s542, 8
        %s544 = scalar_lea.vmem [#allocation14], %s543
        %v546 = vld [vmem:[%s455] sm:$0xff]
        %v547 = vpack.c.bf16 %v546, %v546
        %v548 = vld [vmem:[%s465] sm:$0xff]
        %v549 = vpack.c.bf16 %v548, %v548
        %v550 = vld [vmem:[%s475] sm:$0xff]
        %v551 = vpack.c.bf16 %v550, %v550
        %v552 = vld [vmem:[#allocation8] sm:$0xf]
        %v553 = vld [vmem:[#allocation8 + $0x4] sm:$0xf]
        %v554 = vld [vmem:[#allocation8 + $0x8] sm:$0xf]
        %v555 = vld [vmem:[#allocation8 + $0xc] sm:$0xf]
        %v556 = vld [vmem:[%s4] sm:$0x1]
        %v558 = vperm.slane %v556, 0
        %v564 = vunpack.c.l.b16 %v552
        %v565 = vunpack.c.l.b16 %v553
        %v566 = vunpack.c.l.b16 %v554
        %v567 = vunpack.c.l.b16 %v555
        %v568 = vpack.c.b16 %v565, %v564
        %v569 = vpack.c.b16 %v567, %v566
        %vm572 = vcmask 261120
        %v574 = vsel %vm572, %v547, 0
        %576 = vmatpush.bf16.msra.mxu0 0
        %577 = vmatpush.bf16.msra.mxu0 0
        %578 = vmatpush.bf16.msra.mxu0 0
        %579 = vmatpush.bf16.msra.mxu0 0
        %580 = vmatpush.bf16.msra.mxu0 0
        %581 = vmatpush.bf16.msra.mxu0 0
        %582 = vmatpush.bf16.msra.mxu0 %v569
        %583 = vmatpush.bf16.msra.mxu0 %v568
        %584 = vmatmul.bf16.gmra.mxu0 %v574
        %v585 = vpop.f32.mrf.mxu0
        %v586 = vadd.f32 %v558, %v585
        %v587 = vpop.f32.mrf.mxu0
        %588 = vdwg.mxu0
        %v589 = vld [vmem:[#allocation10] sm:$0xf]
        %v590 = vld [vmem:[#allocation10 + $0x4] sm:$0xf]
        %v591 = vld [vmem:[#allocation10 + $0x8] sm:$0xf]
        %v592 = vld [vmem:[#allocation10 + $0xc] sm:$0xf]
        %v593 = vld [vmem:[%s6] sm:$0x1]
        %v595 = vperm.slane %v593, 0
        %v601 = vunpack.c.l.b16 %v589
        %v602 = vunpack.c.l.b16 %v590
        %v603 = vunpack.c.l.b16 %v591
        %v604 = vunpack.c.l.b16 %v592
        %v605 = vpack.c.b16 %v602, %v601
        %v606 = vpack.c.b16 %v604, %v603
        %v610 = vsel %vm572, %v549, 0
        %612 = vmatpush.bf16.msra.mxu0 0
        %613 = vmatpush.bf16.msra.mxu0 0
        %614 = vmatpush.bf16.msra.mxu0 0
        %615 = vmatpush.bf16.msra.mxu0 0
        %616 = vmatpush.bf16.msra.mxu0 0
        %617 = vmatpush.bf16.msra.mxu0 0
        %618 = vmatpush.bf16.msra.mxu0 %v606
        %619 = vmatpush.bf16.msra.mxu0 %v605
        %620 = vmatmul.bf16.gmra.mxu0 %v610
        %v621 = vpop.f32.mrf.mxu0
        %v622 = vadd.f32 %v595, %v621
        %v623 = vpop.f32.mrf.mxu0
        %624 = vdwg.mxu0
        %v625 = vld [vmem:[#allocation11] sm:$0xf]
        %v626 = vld [vmem:[#allocation11 + $0x4] sm:$0xf]
        %v627 = vld [vmem:[#allocation11 + $0x8] sm:$0xf]
        %v628 = vld [vmem:[#allocation11 + $0xc] sm:$0xf]
        %v629 = vld [vmem:[%s8] sm:$0x1]
        %v631 = vperm.slane %v629, 0
        %v637 = vunpack.c.l.b16 %v625
        %v638 = vunpack.c.l.b16 %v626
        %v639 = vunpack.c.l.b16 %v627
        %v640 = vunpack.c.l.b16 %v628
        %v641 = vpack.c.b16 %v638, %v637
        %v642 = vpack.c.b16 %v640, %v639
        %v646 = vsel %vm572, %v551, 0
        %648 = vmatpush.bf16.msra.mxu0 0
        %649 = vmatpush.bf16.msra.mxu0 0
        %650 = vmatpush.bf16.msra.mxu0 0
        %651 = vmatpush.bf16.msra.mxu0 0
        %652 = vmatpush.bf16.msra.mxu0 0
        %653 = vmatpush.bf16.msra.mxu0 0
        %654 = vmatpush.bf16.msra.mxu0 %v642
        %655 = vmatpush.bf16.msra.mxu0 %v641
        %656 = vmatmul.bf16.gmra.mxu0 %v646
        %v657 = vpop.f32.mrf.mxu0
        %v658 = vadd.f32 %v631, %v657
        %v659 = vpop.f32.mrf.mxu0
        %660 = vdwg.mxu0
        %662 = vrot.lane.b32.xlu0 %v586, 124
        %v663 = vpop.permute.xlu0 %662
        %665 = vrot.lane.b32.xlu0 %v586, 120
        %v666 = vpop.permute.xlu0 %665
        %668 = vrot.lane.b32.xlu0 %v586, 116
        %v669 = vpop.permute.xlu0 %668
        %671 = vrot.lane.b32.xlu0 %v586, 112
        %v672 = vpop.permute.xlu0 %671
        %674 = vrot.lane.b32.xlu0 %v586, 108
        %v675 = vpop.permute.xlu0 %674
        %677 = vrot.lane.b32.xlu0 %v586, 104
        %v678 = vpop.permute.xlu0 %677
        %680 = vrot.lane.b32.xlu0 %v586, 100
        %v681 = vpop.permute.xlu0 %680
        %v683 = vrot.slane %v666, 4
        %vm684 = vcmask 1047556
        %v685 = vsel %vm684, %v683, %v586
        %v686 = vrot.slane %v586, 4
        %v687 = vsel %vm684, %v666, %v686
        %v689 = vunpack.c.l.s4 1983009808
        %v690 = vunpack.c.0.s8 %v689
        %v691 = vperm.slane %v685, %v690
        %v693 = vunpack.c.l.s4 1983009808
        %v694 = vunpack.c.0.s8 %v693
        %v695 = vperm.slane %v687, %v694
        %v696 = vrot.slane %v669, 4
        %v697 = vsel %vm684, %v696, %v663
        %v698 = vrot.slane %v663, 4
        %v699 = vsel %vm684, %v669, %v698
        %v701 = vunpack.c.l.s4 1983009808
        %v702 = vunpack.c.0.s8 %v701
        %v703 = vperm.slane %v697, %v702
        %v705 = vunpack.c.l.s4 1983009808
        %v706 = vunpack.c.0.s8 %v705
        %v707 = vperm.slane %v699, %v706
        %v708 = vrot.slane %v678, 4
        %v709 = vsel %vm684, %v708, %v672
        %v710 = vrot.slane %v672, 4
        %v711 = vsel %vm684, %v678, %v710
        %v713 = vunpack.c.l.s4 1983009808
        %v714 = vunpack.c.0.s8 %v713
        %v715 = vperm.slane %v709, %v714
        %v717 = vunpack.c.l.s4 1983009808
        %v718 = vunpack.c.0.s8 %v717
        %v719 = vperm.slane %v711, %v718
        %v720 = vrot.slane %v681, 4
        %v721 = vsel %vm684, %v720, %v675
        %v722 = vrot.slane %v675, 4
        %v723 = vsel %vm684, %v681, %v722
        %v725 = vunpack.c.l.s4 1983009808
        %v726 = vunpack.c.0.s8 %v725
        %v727 = vperm.slane %v721, %v726
        %v729 = vunpack.c.l.s4 1983009808
        %v730 = vunpack.c.0.s8 %v729
        %v731 = vperm.slane %v723, %v730
        %v732 = vrot.slane %v703, 4
        %v733 = vsel %vm684, %v732, %v691
        %v734 = vrot.slane %v691, 4
        %v735 = vsel %vm684, %v703, %v734
        %v737 = vunpack.c.l.s4 1934713408
        %v738 = vunpack.c.0.s8 %v737
        %v739 = vperm.slane %v733, %v738
        %v741 = vunpack.c.l.s4 1934713408
        %v742 = vunpack.c.0.s8 %v741
        %v743 = vperm.slane %v735, %v742
        %v744 = vrot.slane %v707, 4
        %v745 = vsel %vm684, %v744, %v695
        %v746 = vrot.slane %v695, 4
        %v747 = vsel %vm684, %v707, %v746
        %v749 = vunpack.c.l.s4 1934713408
        %v750 = vunpack.c.0.s8 %v749
        %v751 = vperm.slane %v745, %v750
        %v753 = vunpack.c.l.s4 1934713408
        %v754 = vunpack.c.0.s8 %v753
        %v755 = vperm.slane %v747, %v754
        %v756 = vrot.slane %v727, 4
        %v757 = vsel %vm684, %v756, %v715
        %v758 = vrot.slane %v715, 4
        %v759 = vsel %vm684, %v727, %v758
        %v761 = vunpack.c.l.s4 1934713408
        %v762 = vunpack.c.0.s8 %v761
        %v763 = vperm.slane %v757, %v762
        %v765 = vunpack.c.l.s4 1934713408
        %v766 = vunpack.c.0.s8 %v765
        %v767 = vperm.slane %v759, %v766
        %v768 = vrot.slane %v731, 4
        %v769 = vsel %vm684, %v768, %v719
        %v770 = vrot.slane %v719, 4
        %v771 = vsel %vm684, %v731, %v770
        %v773 = vunpack.c.l.s4 1934713408
        %v774 = vunpack.c.0.s8 %v773
        %v775 = vperm.slane %v769, %v774
        %v777 = vunpack.c.l.s4 1934713408
        %v778 = vunpack.c.0.s8 %v777
        %v779 = vperm.slane %v771, %v778
        %v780 = vrot.slane %v763, 4
        %v781 = vsel %vm684, %v780, %v739
        %v782 = vrot.slane %v739, 4
        %v783 = vsel %vm684, %v763, %v782
        %v784 = vrot.slane %v767, 4
        %v785 = vsel %vm684, %v784, %v743
        %v786 = vrot.slane %v743, 4
        %v787 = vsel %vm684, %v767, %v786
        %v788 = vrot.slane %v775, 4
        %v789 = vsel %vm684, %v788, %v751
        %v790 = vrot.slane %v751, 4
        %v791 = vsel %vm684, %v775, %v790
        %v792 = vrot.slane %v779, 4
        %v793 = vsel %vm684, %v792, %v755
        %v794 = vrot.slane %v755, 4
        %v795 = vsel %vm684, %v779, %v794
        %v796 = vrot.slane %v785, 4
        %v797 = vsel %vm684, %v796, %v781
        %v798 = vrot.slane %v781, 4
        %v799 = vsel %vm684, %v785, %v798
        %v801 = vunpack.c.l.s4 1983009808
        %v802 = vunpack.c.0.s8 %v801
        %v803 = vperm.slane %v797, %v802
        %v805 = vunpack.c.l.s4 1983009808
        %v806 = vunpack.c.0.s8 %v805
        %v807 = vperm.slane %v799, %v806
        %v808 = vrot.slane %v787, 4
        %v809 = vsel %vm684, %v808, %v783
        %v810 = vrot.slane %v783, 4
        %v811 = vsel %vm684, %v787, %v810
        %v813 = vunpack.c.l.s4 1983009808
        %v814 = vunpack.c.0.s8 %v813
        %v815 = vperm.slane %v809, %v814
        %v817 = vunpack.c.l.s4 1983009808
        %v818 = vunpack.c.0.s8 %v817
        %v819 = vperm.slane %v811, %v818
        %v820 = vrot.slane %v793, 4
        %v821 = vsel %vm684, %v820, %v789
        %v822 = vrot.slane %v789, 4
        %v823 = vsel %vm684, %v793, %v822
        %v825 = vunpack.c.l.s4 1983009808
        %v826 = vunpack.c.0.s8 %v825
        %v827 = vperm.slane %v821, %v826
        %v829 = vunpack.c.l.s4 1983009808
        %v830 = vunpack.c.0.s8 %v829
        %v831 = vperm.slane %v823, %v830
        %v832 = vrot.slane %v795, 4
        %v833 = vsel %vm684, %v832, %v791
        %v834 = vrot.slane %v791, 4
        %v835 = vsel %vm684, %v795, %v834
        %v837 = vunpack.c.l.s4 1983009808
        %v838 = vunpack.c.0.s8 %v837
        %v839 = vperm.slane %v833, %v838
        %v841 = vunpack.c.l.s4 1983009808
        %v842 = vunpack.c.0.s8 %v841
        %v843 = vperm.slane %v835, %v842
        %v844 = vrot.slane %v815, 4
        %v845 = vsel %vm684, %v844, %v803
        %v846 = vrot.slane %v803, 4
        %v847 = vsel %vm684, %v815, %v846
        %v849 = vunpack.c.l.s4 1934713408
        %v850 = vunpack.c.0.s8 %v849
        %v851 = vperm.slane %v845, %v850
        %v853 = vunpack.c.l.s4 1934713408
        %v854 = vunpack.c.0.s8 %v853
        %v855 = vperm.slane %v847, %v854
        %v856 = vrot.slane %v819, 4
        %v857 = vsel %vm684, %v856, %v807
        %v858 = vrot.slane %v807, 4
        %v859 = vsel %vm684, %v819, %v858
        %v861 = vunpack.c.l.s4 1934713408
        %v862 = vunpack.c.0.s8 %v861
        %v863 = vperm.slane %v857, %v862
        %v865 = vunpack.c.l.s4 1934713408
        %v866 = vunpack.c.0.s8 %v865
        %v867 = vperm.slane %v859, %v866
        %v868 = vrot.slane %v839, 4
        %v869 = vsel %vm684, %v868, %v827
        %v870 = vrot.slane %v827, 4
        %v871 = vsel %vm684, %v839, %v870
        %v873 = vunpack.c.l.s4 1934713408
        %v874 = vunpack.c.0.s8 %v873
        %v875 = vperm.slane %v869, %v874
        %v877 = vunpack.c.l.s4 1934713408
        %v878 = vunpack.c.0.s8 %v877
        %v879 = vperm.slane %v871, %v878
        %v880 = vrot.slane %v843, 4
        %v881 = vsel %vm684, %v880, %v831
        %v882 = vrot.slane %v831, 4
        %v883 = vsel %vm684, %v843, %v882
        %v885 = vunpack.c.l.s4 1934713408
        %v886 = vunpack.c.0.s8 %v885
        %v887 = vperm.slane %v881, %v886
        %v889 = vunpack.c.l.s4 1934713408
        %v890 = vunpack.c.0.s8 %v889
        %v891 = vperm.slane %v883, %v890
        %v892 = vrot.slane %v875, 4
        %v893 = vsel %vm684, %v892, %v851
        %v894 = vrot.slane %v851, 4
        %v895 = vsel %vm684, %v875, %v894
        %v896 = vrot.slane %v879, 4
        %v897 = vsel %vm684, %v896, %v855
        %v898 = vrot.slane %v855, 4
        %v899 = vsel %vm684, %v879, %v898
        %v900 = vrot.slane %v887, 4
        %v901 = vsel %vm684, %v900, %v863
        %v902 = vrot.slane %v863, 4
        %v903 = vsel %vm684, %v887, %v902
        %v904 = vrot.slane %v891, 4
        %v905 = vsel %vm684, %v904, %v867
        %v906 = vrot.slane %v867, 4
        %v907 = vsel %vm684, %v891, %v906
        %v908 = vpack.c.bf16 %v893, %v893
        %v909 = vpack.c.bf16 %v895, %v895
        %v910 = vpack.c.bf16 %v897, %v897
        %v911 = vpack.c.bf16 %v899, %v899
        %v912 = vpack.c.bf16 %v901, %v901
        %v913 = vpack.c.bf16 %v903, %v903
        %v914 = vpack.c.bf16 %v905, %v905
        %v915 = vpack.c.bf16 %v907, %v907
        %917 = vrot.lane.b32.xlu0 %v622, 124
        %v918 = vpop.permute.xlu0 %917
        %920 = vrot.lane.b32.xlu0 %v622, 120
        %v921 = vpop.permute.xlu0 %920
        %923 = vrot.lane.b32.xlu0 %v622, 116
        %v924 = vpop.permute.xlu0 %923
        %926 = vrot.lane.b32.xlu0 %v622, 112
        %v927 = vpop.permute.xlu0 %926
        %929 = vrot.lane.b32.xlu0 %v622, 108
        %v930 = vpop.permute.xlu0 %929
        %932 = vrot.lane.b32.xlu0 %v622, 104
        %v933 = vpop.permute.xlu0 %932
        %935 = vrot.lane.b32.xlu0 %v622, 100
        %v936 = vpop.permute.xlu0 %935
        %v938 = vrot.slane %v921, 4
        %v939 = vsel %vm684, %v938, %v622
        %v940 = vrot.slane %v622, 4
        %v941 = vsel %vm684, %v921, %v940
        %v943 = vunpack.c.l.s4 1983009808
        %v944 = vunpack.c.0.s8 %v943
        %v945 = vperm.slane %v939, %v944
        %v947 = vunpack.c.l.s4 1983009808
        %v948 = vunpack.c.0.s8 %v947
        %v949 = vperm.slane %v941, %v948
        %v950 = vrot.slane %v924, 4
        %v951 = vsel %vm684, %v950, %v918
        %v952 = vrot.slane %v918, 4
        %v953 = vsel %vm684, %v924, %v952
        %v955 = vunpack.c.l.s4 1983009808
        %v956 = vunpack.c.0.s8 %v955
        %v957 = vperm.slane %v951, %v956
        %v959 = vunpack.c.l.s4 1983009808
        %v960 = vunpack.c.0.s8 %v959
        %v961 = vperm.slane %v953, %v960
        %v962 = vrot.slane %v933, 4
        %v963 = vsel %vm684, %v962, %v927
        %v964 = vrot.slane %v927, 4
        %v965 = vsel %vm684, %v933, %v964
        %v967 = vunpack.c.l.s4 1983009808
        %v968 = vunpack.c.0.s8 %v967
        %v969 = vperm.slane %v963, %v968
        %v971 = vunpack.c.l.s4 1983009808
        %v972 = vunpack.c.0.s8 %v971
        %v973 = vperm.slane %v965, %v972
        %v974 = vrot.slane %v936, 4
        %v975 = vsel %vm684, %v974, %v930
        %v976 = vrot.slane %v930, 4
        %v977 = vsel %vm684, %v936, %v976
        %v979 = vunpack.c.l.s4 1983009808
        %v980 = vunpack.c.0.s8 %v979
        %v981 = vperm.slane %v975, %v980
        %v983 = vunpack.c.l.s4 1983009808
        %v984 = vunpack.c.0.s8 %v983
        %v985 = vperm.slane %v977, %v984
        %v986 = vrot.slane %v957, 4
        %v987 = vsel %vm684, %v986, %v945
        %v988 = vrot.slane %v945, 4
        %v989 = vsel %vm684, %v957, %v988
        %v991 = vunpack.c.l.s4 1934713408
        %v992 = vunpack.c.0.s8 %v991
        %v993 = vperm.slane %v987, %v992
        %v995 = vunpack.c.l.s4 1934713408
        %v996 = vunpack.c.0.s8 %v995
        %v997 = vperm.slane %v989, %v996
        %v998 = vrot.slane %v961, 4
        %v999 = vsel %vm684, %v998, %v949
        %v1000 = vrot.slane %v949, 4
        %v1001 = vsel %vm684, %v961, %v1000
        %v1003 = vunpack.c.l.s4 1934713408
        %v1004 = vunpack.c.0.s8 %v1003
        %v1005 = vperm.slane %v999, %v1004
        %v1007 = vunpack.c.l.s4 1934713408
        %v1008 = vunpack.c.0.s8 %v1007
        %v1009 = vperm.slane %v1001, %v1008
        %v1010 = vrot.slane %v981, 4
        %v1011 = vsel %vm684, %v1010, %v969
        %v1012 = vrot.slane %v969, 4
        %v1013 = vsel %vm684, %v981, %v1012
        %v1015 = vunpack.c.l.s4 1934713408
        %v1016 = vunpack.c.0.s8 %v1015
        %v1017 = vperm.slane %v1011, %v1016
        %v1019 = vunpack.c.l.s4 1934713408
        %v1020 = vunpack.c.0.s8 %v1019
        %v1021 = vperm.slane %v1013, %v1020
        %v1022 = vrot.slane %v985, 4
        %v1023 = vsel %vm684, %v1022, %v973
        %v1024 = vrot.slane %v973, 4
        %v1025 = vsel %vm684, %v985, %v1024
        %v1027 = vunpack.c.l.s4 1934713408
        %v1028 = vunpack.c.0.s8 %v1027
        %v1029 = vperm.slane %v1023, %v1028
        %v1031 = vunpack.c.l.s4 1934713408
        %v1032 = vunpack.c.0.s8 %v1031
        %v1033 = vperm.slane %v1025, %v1032
        %v1034 = vrot.slane %v1017, 4
        %v1035 = vsel %vm684, %v1034, %v993
        %v1036 = vrot.slane %v993, 4
        %v1037 = vsel %vm684, %v1017, %v1036
        %v1038 = vrot.slane %v1021, 4
        %v1039 = vsel %vm684, %v1038, %v997
        %v1040 = vrot.slane %v997, 4
        %v1041 = vsel %vm684, %v1021, %v1040
        %v1042 = vrot.slane %v1029, 4
        %v1043 = vsel %vm684, %v1042, %v1005
        %v1044 = vrot.slane %v1005, 4
        %v1045 = vsel %vm684, %v1029, %v1044
        %v1046 = vrot.slane %v1033, 4
        %v1047 = vsel %vm684, %v1046, %v1009
        %v1048 = vrot.slane %v1009, 4
        %v1049 = vsel %vm684, %v1033, %v1048
        %v1050 = vrot.slane %v1039, 4
        %v1051 = vsel %vm684, %v1050, %v1035
        %v1052 = vrot.slane %v1035, 4
        %v1053 = vsel %vm684, %v1039, %v1052
        %v1055 = vunpack.c.l.s4 1983009808
        %v1056 = vunpack.c.0.s8 %v1055
        %v1057 = vperm.slane %v1051, %v1056
        %v1059 = vunpack.c.l.s4 1983009808
        %v1060 = vunpack.c.0.s8 %v1059
        %v1061 = vperm.slane %v1053, %v1060
        %v1062 = vrot.slane %v1041, 4
        %v1063 = vsel %vm684, %v1062, %v1037
        %v1064 = vrot.slane %v1037, 4
        %v1065 = vsel %vm684, %v1041, %v1064
        %v1067 = vunpack.c.l.s4 1983009808
        %v1068 = vunpack.c.0.s8 %v1067
        %v1069 = vperm.slane %v1063, %v1068
        %v1071 = vunpack.c.l.s4 1983009808
        %v1072 = vunpack.c.0.s8 %v1071
        %v1073 = vperm.slane %v1065, %v1072
        %v1074 = vrot.slane %v1047, 4
        %v1075 = vsel %vm684, %v1074, %v1043
        %v1076 = vrot.slane %v1043, 4
        %v1077 = vsel %vm684, %v1047, %v1076
        %v1079 = vunpack.c.l.s4 1983009808
        %v1080 = vunpack.c.0.s8 %v1079
        %v1081 = vperm.slane %v1075, %v1080
        %v1083 = vunpack.c.l.s4 1983009808
        %v1084 = vunpack.c.0.s8 %v1083
        %v1085 = vperm.slane %v1077, %v1084
        %v1086 = vrot.slane %v1049, 4
        %v1087 = vsel %vm684, %v1086, %v1045
        %v1088 = vrot.slane %v1045, 4
        %v1089 = vsel %vm684, %v1049, %v1088
        %v1091 = vunpack.c.l.s4 1983009808
        %v1092 = vunpack.c.0.s8 %v1091
        %v1093 = vperm.slane %v1087, %v1092
        %v1095 = vunpack.c.l.s4 1983009808
        %v1096 = vunpack.c.0.s8 %v1095
        %v1097 = vperm.slane %v1089, %v1096
        %v1098 = vrot.slane %v1069, 4
        %v1099 = vsel %vm684, %v1098, %v1057
        %v1100 = vrot.slane %v1057, 4
        %v1101 = vsel %vm684, %v1069, %v1100
        %v1103 = vunpack.c.l.s4 1934713408
        %v1104 = vunpack.c.0.s8 %v1103
        %v1105 = vperm.slane %v1099, %v1104
        %v1107 = vunpack.c.l.s4 1934713408
        %v1108 = vunpack.c.0.s8 %v1107
        %v1109 = vperm.slane %v1101, %v1108
        %v1110 = vrot.slane %v1073, 4
        %v1111 = vsel %vm684, %v1110, %v1061
        %v1112 = vrot.slane %v1061, 4
        %v1113 = vsel %vm684, %v1073, %v1112
        %v1115 = vunpack.c.l.s4 1934713408
        %v1116 = vunpack.c.0.s8 %v1115
        %v1117 = vperm.slane %v1111, %v1116
        %v1119 = vunpack.c.l.s4 1934713408
        %v1120 = vunpack.c.0.s8 %v1119
        %v1121 = vperm.slane %v1113, %v1120
        %v1122 = vrot.slane %v1093, 4
        %v1123 = vsel %vm684, %v1122, %v1081
        %v1124 = vrot.slane %v1081, 4
        %v1125 = vsel %vm684, %v1093, %v1124
        %v1127 = vunpack.c.l.s4 1934713408
        %v1128 = vunpack.c.0.s8 %v1127
        %v1129 = vperm.slane %v1123, %v1128
        %v1131 = vunpack.c.l.s4 1934713408
        %v1132 = vunpack.c.0.s8 %v1131
        %v1133 = vperm.slane %v1125, %v1132
        %v1134 = vrot.slane %v1097, 4
        %v1135 = vsel %vm684, %v1134, %v1085
        %v1136 = vrot.slane %v1085, 4
        %v1137 = vsel %vm684, %v1097, %v1136
        %v1139 = vunpack.c.l.s4 1934713408
        %v1140 = vunpack.c.0.s8 %v1139
        %v1141 = vperm.slane %v1135, %v1140
        %v1143 = vunpack.c.l.s4 1934713408
        %v1144 = vunpack.c.0.s8 %v1143
        %v1145 = vperm.slane %v1137, %v1144
        %v1146 = vrot.slane %v1129, 4
        %v1147 = vsel %vm684, %v1146, %v1105
        %v1148 = vrot.slane %v1105, 4
        %v1149 = vsel %vm684, %v1129, %v1148
        %v1150 = vrot.slane %v1133, 4
        %v1151 = vsel %vm684, %v1150, %v1109
        %v1152 = vrot.slane %v1109, 4
        %v1153 = vsel %vm684, %v1133, %v1152
        %v1154 = vrot.slane %v1141, 4
        %v1155 = vsel %vm684, %v1154, %v1117
        %v1156 = vrot.slane %v1117, 4
        %v1157 = vsel %vm684, %v1141, %v1156
        %v1158 = vrot.slane %v1145, 4
        %v1159 = vsel %vm684, %v1158, %v1121
        %v1160 = vrot.slane %v1121, 4
        %v1161 = vsel %vm684, %v1145, %v1160
        %v1162 = vpack.c.bf16 %v1147, %v1147
        %v1163 = vpack.c.bf16 %v1149, %v1149
        %v1164 = vpack.c.bf16 %v1151, %v1151
        %v1165 = vpack.c.bf16 %v1153, %v1153
        %v1166 = vpack.c.bf16 %v1155, %v1155
        %v1167 = vpack.c.bf16 %v1157, %v1157
        %v1168 = vpack.c.bf16 %v1159, %v1159
        %v1169 = vpack.c.bf16 %v1161, %v1161
        %1171 = vrot.lane.b32.xlu0 %v658, 124
        %v1172 = vpop.permute.xlu0 %1171
        %1174 = vrot.lane.b32.xlu0 %v658, 120
        %v1175 = vpop.permute.xlu0 %1174
        %1177 = vrot.lane.b32.xlu0 %v658, 116
        %v1178 = vpop.permute.xlu0 %1177
        %1180 = vrot.lane.b32.xlu0 %v658, 112
        %v1181 = vpop.permute.xlu0 %1180
        %1183 = vrot.lane.b32.xlu0 %v658, 108
        %v1184 = vpop.permute.xlu0 %1183
        %1186 = vrot.lane.b32.xlu0 %v658, 104
        %v1187 = vpop.permute.xlu0 %1186
        %1189 = vrot.lane.b32.xlu0 %v658, 100
        %v1190 = vpop.permute.xlu0 %1189
        %v1192 = vrot.slane %v1175, 4
        %v1193 = vsel %vm684, %v1192, %v658
        %v1194 = vrot.slane %v658, 4
        %v1195 = vsel %vm684, %v1175, %v1194
        %v1197 = vunpack.c.l.s4 1983009808
        %v1198 = vunpack.c.0.s8 %v1197
        %v1199 = vperm.slane %v1193, %v1198
        %v1201 = vunpack.c.l.s4 1983009808
        %v1202 = vunpack.c.0.s8 %v1201
        %v1203 = vperm.slane %v1195, %v1202
        %v1204 = vrot.slane %v1178, 4
        %v1205 = vsel %vm684, %v1204, %v1172
        %v1206 = vrot.slane %v1172, 4
        %v1207 = vsel %vm684, %v1178, %v1206
        %v1209 = vunpack.c.l.s4 1983009808
        %v1210 = vunpack.c.0.s8 %v1209
        %v1211 = vperm.slane %v1205, %v1210
        %v1213 = vunpack.c.l.s4 1983009808
        %v1214 = vunpack.c.0.s8 %v1213
        %v1215 = vperm.slane %v1207, %v1214
        %v1216 = vrot.slane %v1187, 4
        %v1217 = vsel %vm684, %v1216, %v1181
        %v1218 = vrot.slane %v1181, 4
        %v1219 = vsel %vm684, %v1187, %v1218
        %v1221 = vunpack.c.l.s4 1983009808
        %v1222 = vunpack.c.0.s8 %v1221
        %v1223 = vperm.slane %v1217, %v1222
        %v1225 = vunpack.c.l.s4 1983009808
        %v1226 = vunpack.c.0.s8 %v1225
        %v1227 = vperm.slane %v1219, %v1226
        %v1228 = vrot.slane %v1190, 4
        %v1229 = vsel %vm684, %v1228, %v1184
        %v1230 = vrot.slane %v1184, 4
        %v1231 = vsel %vm684, %v1190, %v1230
        %v1233 = vunpack.c.l.s4 1983009808
        %v1234 = vunpack.c.0.s8 %v1233
        %v1235 = vperm.slane %v1229, %v1234
        %v1237 = vunpack.c.l.s4 1983009808
        %v1238 = vunpack.c.0.s8 %v1237
        %v1239 = vperm.slane %v1231, %v1238
        %v1240 = vrot.slane %v1211, 4
        %v1241 = vsel %vm684, %v1240, %v1199
        %v1242 = vrot.slane %v1199, 4
        %v1243 = vsel %vm684, %v1211, %v1242
        %v1245 = vunpack.c.l.s4 1934713408
        %v1246 = vunpack.c.0.s8 %v1245
        %v1247 = vperm.slane %v1241, %v1246
        %v1249 = vunpack.c.l.s4 1934713408
        %v1250 = vunpack.c.0.s8 %v1249
        %v1251 = vperm.slane %v1243, %v1250
        %v1252 = vrot.slane %v1215, 4
        %v1253 = vsel %vm684, %v1252, %v1203
        %v1254 = vrot.slane %v1203, 4
        %v1255 = vsel %vm684, %v1215, %v1254
        %v1257 = vunpack.c.l.s4 1934713408
        %v1258 = vunpack.c.0.s8 %v1257
        %v1259 = vperm.slane %v1253, %v1258
        %v1261 = vunpack.c.l.s4 1934713408
        %v1262 = vunpack.c.0.s8 %v1261
        %v1263 = vperm.slane %v1255, %v1262
        %v1264 = vrot.slane %v1235, 4
        %v1265 = vsel %vm684, %v1264, %v1223
        %v1266 = vrot.slane %v1223, 4
        %v1267 = vsel %vm684, %v1235, %v1266
        %v1269 = vunpack.c.l.s4 1934713408
        %v1270 = vunpack.c.0.s8 %v1269
        %v1271 = vperm.slane %v1265, %v1270
        %v1273 = vunpack.c.l.s4 1934713408
        %v1274 = vunpack.c.0.s8 %v1273
        %v1275 = vperm.slane %v1267, %v1274
        %v1276 = vrot.slane %v1239, 4
        %v1277 = vsel %vm684, %v1276, %v1227
        %v1278 = vrot.slane %v1227, 4
        %v1279 = vsel %vm684, %v1239, %v1278
        %v1281 = vunpack.c.l.s4 1934713408
        %v1282 = vunpack.c.0.s8 %v1281
        %v1283 = vperm.slane %v1277, %v1282
        %v1285 = vunpack.c.l.s4 1934713408
        %v1286 = vunpack.c.0.s8 %v1285
        %v1287 = vperm.slane %v1279, %v1286
        %v1288 = vrot.slane %v1271, 4
        %v1289 = vsel %vm684, %v1288, %v1247
        %v1290 = vrot.slane %v1247, 4
        %v1291 = vsel %vm684, %v1271, %v1290
        %v1292 = vrot.slane %v1275, 4
        %v1293 = vsel %vm684, %v1292, %v1251
        %v1294 = vrot.slane %v1251, 4
        %v1295 = vsel %vm684, %v1275, %v1294
        %v1296 = vrot.slane %v1283, 4
        %v1297 = vsel %vm684, %v1296, %v1259
        %v1298 = vrot.slane %v1259, 4
        %v1299 = vsel %vm684, %v1283, %v1298
        %v1300 = vrot.slane %v1287, 4
        %v1301 = vsel %vm684, %v1300, %v1263
        %v1302 = vrot.slane %v1263, 4
        %v1303 = vsel %vm684, %v1287, %v1302
        %v1304 = vrot.slane %v1293, 4
        %v1305 = vsel %vm684, %v1304, %v1289
        %v1306 = vrot.slane %v1289, 4
        %v1307 = vsel %vm684, %v1293, %v1306
        %v1309 = vunpack.c.l.s4 1983009808
        %v1310 = vunpack.c.0.s8 %v1309
        %v1311 = vperm.slane %v1305, %v1310
        %v1313 = vunpack.c.l.s4 1983009808
        %v1314 = vunpack.c.0.s8 %v1313
        %v1315 = vperm.slane %v1307, %v1314
        %v1316 = vrot.slane %v1295, 4
        %v1317 = vsel %vm684, %v1316, %v1291
        %v1318 = vrot.slane %v1291, 4
        %v1319 = vsel %vm684, %v1295, %v1318
        %v1321 = vunpack.c.l.s4 1983009808
        %v1322 = vunpack.c.0.s8 %v1321
        %v1323 = vperm.slane %v1317, %v1322
        %v1325 = vunpack.c.l.s4 1983009808
        %v1326 = vunpack.c.0.s8 %v1325
        %v1327 = vperm.slane %v1319, %v1326
        %v1328 = vrot.slane %v1301, 4
        %v1329 = vsel %vm684, %v1328, %v1297
        %v1330 = vrot.slane %v1297, 4
        %v1331 = vsel %vm684, %v1301, %v1330
        %v1333 = vunpack.c.l.s4 1983009808
        %v1334 = vunpack.c.0.s8 %v1333
        %v1335 = vperm.slane %v1329, %v1334
        %v1337 = vunpack.c.l.s4 1983009808
        %v1338 = vunpack.c.0.s8 %v1337
        %v1339 = vperm.slane %v1331, %v1338
        %v1340 = vrot.slane %v1303, 4
        %v1341 = vsel %vm684, %v1340, %v1299
        %v1342 = vrot.slane %v1299, 4
        %v1343 = vsel %vm684, %v1303, %v1342
        %v1345 = vunpack.c.l.s4 1983009808
        %v1346 = vunpack.c.0.s8 %v1345
        %v1347 = vperm.slane %v1341, %v1346
        %v1349 = vunpack.c.l.s4 1983009808
        %v1350 = vunpack.c.0.s8 %v1349
        %v1351 = vperm.slane %v1343, %v1350
        %v1352 = vrot.slane %v1323, 4
        %v1353 = vsel %vm684, %v1352, %v1311
        %v1354 = vrot.slane %v1311, 4
        %v1355 = vsel %vm684, %v1323, %v1354
        %v1357 = vunpack.c.l.s4 1934713408
        %v1358 = vunpack.c.0.s8 %v1357
        %v1359 = vperm.slane %v1353, %v1358
        %v1361 = vunpack.c.l.s4 1934713408
        %v1362 = vunpack.c.0.s8 %v1361
        %v1363 = vperm.slane %v1355, %v1362
        %v1364 = vrot.slane %v1327, 4
        %v1365 = vsel %vm684, %v1364, %v1315
        %v1366 = vrot.slane %v1315, 4
        %v1367 = vsel %vm684, %v1327, %v1366
        %v1369 = vunpack.c.l.s4 1934713408
        %v1370 = vunpack.c.0.s8 %v1369
        %v1371 = vperm.slane %v1365, %v1370
        %v1373 = vunpack.c.l.s4 1934713408
        %v1374 = vunpack.c.0.s8 %v1373
        %v1375 = vperm.slane %v1367, %v1374
        %v1376 = vrot.slane %v1347, 4
        %v1377 = vsel %vm684, %v1376, %v1335
        %v1378 = vrot.slane %v1335, 4
        %v1379 = vsel %vm684, %v1347, %v1378
        %v1381 = vunpack.c.l.s4 1934713408
        %v1382 = vunpack.c.0.s8 %v1381
        %v1383 = vperm.slane %v1377, %v1382
        %v1385 = vunpack.c.l.s4 1934713408
        %v1386 = vunpack.c.0.s8 %v1385
        %v1387 = vperm.slane %v1379, %v1386
        %v1388 = vrot.slane %v1351, 4
        %v1389 = vsel %vm684, %v1388, %v1339
        %v1390 = vrot.slane %v1339, 4
        %v1391 = vsel %vm684, %v1351, %v1390
        %v1393 = vunpack.c.l.s4 1934713408
        %v1394 = vunpack.c.0.s8 %v1393
        %v1395 = vperm.slane %v1389, %v1394
        %v1397 = vunpack.c.l.s4 1934713408
        %v1398 = vunpack.c.0.s8 %v1397
        %v1399 = vperm.slane %v1391, %v1398
        %v1400 = vrot.slane %v1383, 4
        %v1401 = vsel %vm684, %v1400, %v1359
        %v1402 = vrot.slane %v1359, 4
        %v1403 = vsel %vm684, %v1383, %v1402
        %v1404 = vrot.slane %v1387, 4
        %v1405 = vsel %vm684, %v1404, %v1363
        %v1406 = vrot.slane %v1363, 4
        %v1407 = vsel %vm684, %v1387, %v1406
        %v1408 = vrot.slane %v1395, 4
        %v1409 = vsel %vm684, %v1408, %v1371
        %v1410 = vrot.slane %v1371, 4
        %v1411 = vsel %vm684, %v1395, %v1410
        %v1412 = vrot.slane %v1399, 4
        %v1413 = vsel %vm684, %v1412, %v1375
        %v1414 = vrot.slane %v1375, 4
        %v1415 = vsel %vm684, %v1399, %v1414
        %v1416 = vpack.c.bf16 %v1401, %v1401
        %v1417 = vpack.c.bf16 %v1403, %v1403
        %v1418 = vpack.c.bf16 %v1405, %v1405
        %v1419 = vpack.c.bf16 %v1407, %v1407
        %v1420 = vpack.c.bf16 %v1409, %v1409
        %v1421 = vpack.c.bf16 %v1411, %v1411
        %v1422 = vpack.c.bf16 %v1413, %v1413
        %v1423 = vpack.c.bf16 %v1415, %v1415
        %vm1424 = vcmask 31744
        %v1426 = vsel %vm1424, %v908, 0
        %v1429 = vsel %vm1424, %v1162, 0
        %1431 = vmatpush.bf16.xpose.msra.mxu0 0
        %1432 = vmatpush.bf16.xpose.msra.mxu0 0
        %1433 = vmatpush.bf16.xpose.msra.mxu0 0
        %1434 = vmatpush.bf16.xpose.msra.mxu0 0
        %1435 = vmatpush.bf16.xpose.msra.mxu0 0
        %1436 = vmatpush.bf16.xpose.msra.mxu0 0
        %1437 = vmatpush.bf16.xpose.msra.mxu0 0
        %1438 = vmatpush.bf16.xpose.msra.mxu0 %v1429
        %1439 = vmatmul.bf16.gmra.mxu0 %v1426
        %v1440 = vpop.f32.mrf.mxu0
        %v1441 = vadd.f32 0.0, %v1440
        %v1442 = vpop.f32.mrf.mxu0
        %1443 = vdwg.mxu0
        %v1445 = vsel %vm1424, %v909, 0
        %v1448 = vsel %vm1424, %v1163, 0
        %1450 = vmatpush.bf16.xpose.msra.mxu0 0
        %1451 = vmatpush.bf16.xpose.msra.mxu0 0
        %1452 = vmatpush.bf16.xpose.msra.mxu0 0
        %1453 = vmatpush.bf16.xpose.msra.mxu0 0
        %1454 = vmatpush.bf16.xpose.msra.mxu0 0
        %1455 = vmatpush.bf16.xpose.msra.mxu0 0
        %1456 = vmatpush.bf16.xpose.msra.mxu0 0
        %1457 = vmatpush.bf16.xpose.msra.mxu0 %v1448
        %1458 = vmatmul.bf16.gmra.mxu0 %v1445
        %v1459 = vpop.f32.mrf.mxu0
        %v1460 = vadd.f32 0.0, %v1459
        %v1461 = vpop.f32.mrf.mxu0
        %1462 = vdwg.mxu0
        %v1464 = vsel %vm1424, %v910, 0
        %v1467 = vsel %vm1424, %v1164, 0
        %1469 = vmatpush.bf16.xpose.msra.mxu0 0
        %1470 = vmatpush.bf16.xpose.msra.mxu0 0
        %1471 = vmatpush.bf16.xpose.msra.mxu0 0
        %1472 = vmatpush.bf16.xpose.msra.mxu0 0
        %1473 = vmatpush.bf16.xpose.msra.mxu0 0
        %1474 = vmatpush.bf16.xpose.msra.mxu0 0
        %1475 = vmatpush.bf16.xpose.msra.mxu0 0
        %1476 = vmatpush.bf16.xpose.msra.mxu0 %v1467
        %1477 = vmatmul.bf16.gmra.mxu0 %v1464
        %v1478 = vpop.f32.mrf.mxu0
        %v1479 = vadd.f32 0.0, %v1478
        %v1480 = vpop.f32.mrf.mxu0
        %1481 = vdwg.mxu0
        %v1483 = vsel %vm1424, %v911, 0
        %v1486 = vsel %vm1424, %v1165, 0
        %1488 = vmatpush.bf16.xpose.msra.mxu0 0
        %1489 = vmatpush.bf16.xpose.msra.mxu0 0
        %1490 = vmatpush.bf16.xpose.msra.mxu0 0
        %1491 = vmatpush.bf16.xpose.msra.mxu0 0
        %1492 = vmatpush.bf16.xpose.msra.mxu0 0
        %1493 = vmatpush.bf16.xpose.msra.mxu0 0
        %1494 = vmatpush.bf16.xpose.msra.mxu0 0
        %1495 = vmatpush.bf16.xpose.msra.mxu0 %v1486
        %1496 = vmatmul.bf16.gmra.mxu0 %v1483
        %v1497 = vpop.f32.mrf.mxu0
        %v1498 = vadd.f32 0.0, %v1497
        %v1499 = vpop.f32.mrf.mxu0
        %1500 = vdwg.mxu0
        %v1502 = vsel %vm1424, %v912, 0
        %v1505 = vsel %vm1424, %v1166, 0
        %1507 = vmatpush.bf16.xpose.msra.mxu0 0
        %1508 = vmatpush.bf16.xpose.msra.mxu0 0
        %1509 = vmatpush.bf16.xpose.msra.mxu0 0
        %1510 = vmatpush.bf16.xpose.msra.mxu0 0
        %1511 = vmatpush.bf16.xpose.msra.mxu0 0
        %1512 = vmatpush.bf16.xpose.msra.mxu0 0
        %1513 = vmatpush.bf16.xpose.msra.mxu0 0
        %1514 = vmatpush.bf16.xpose.msra.mxu0 %v1505
        %1515 = vmatmul.bf16.gmra.mxu0 %v1502
        %v1516 = vpop.f32.mrf.mxu0
        %v1517 = vadd.f32 0.0, %v1516
        %v1518 = vpop.f32.mrf.mxu0
        %1519 = vdwg.mxu0
        %v1521 = vsel %vm1424, %v913, 0
        %v1524 = vsel %vm1424, %v1167, 0
        %1526 = vmatpush.bf16.xpose.msra.mxu0 0
        %1527 = vmatpush.bf16.xpose.msra.mxu0 0
        %1528 = vmatpush.bf16.xpose.msra.mxu0 0
        %1529 = vmatpush.bf16.xpose.msra.mxu0 0
        %1530 = vmatpush.bf16.xpose.msra.mxu0 0
        %1531 = vmatpush.bf16.xpose.msra.mxu0 0
        %1532 = vmatpush.bf16.xpose.msra.mxu0 0
        %1533 = vmatpush.bf16.xpose.msra.mxu0 %v1524
        %1534 = vmatmul.bf16.gmra.mxu0 %v1521
        %v1535 = vpop.f32.mrf.mxu0
        %v1536 = vadd.f32 0.0, %v1535
        %v1537 = vpop.f32.mrf.mxu0
        %1538 = vdwg.mxu0
        %v1540 = vsel %vm1424, %v914, 0
        %v1543 = vsel %vm1424, %v1168, 0
        %1545 = vmatpush.bf16.xpose.msra.mxu0 0
        %1546 = vmatpush.bf16.xpose.msra.mxu0 0
        %1547 = vmatpush.bf16.xpose.msra.mxu0 0
        %1548 = vmatpush.bf16.xpose.msra.mxu0 0
        %1549 = vmatpush.bf16.xpose.msra.mxu0 0
        %1550 = vmatpush.bf16.xpose.msra.mxu0 0
        %1551 = vmatpush.bf16.xpose.msra.mxu0 0
        %1552 = vmatpush.bf16.xpose.msra.mxu0 %v1543
        %1553 = vmatmul.bf16.gmra.mxu0 %v1540
        %v1554 = vpop.f32.mrf.mxu0
        %v1555 = vadd.f32 0.0, %v1554
        %v1556 = vpop.f32.mrf.mxu0
        %1557 = vdwg.mxu0
        %v1559 = vsel %vm1424, %v915, 0
        %v1562 = vsel %vm1424, %v1169, 0
        %1564 = vmatpush.bf16.xpose.msra.mxu0 0
        %1565 = vmatpush.bf16.xpose.msra.mxu0 0
        %1566 = vmatpush.bf16.xpose.msra.mxu0 0
        %1567 = vmatpush.bf16.xpose.msra.mxu0 0
        %1568 = vmatpush.bf16.xpose.msra.mxu0 0
        %1569 = vmatpush.bf16.xpose.msra.mxu0 0
        %1570 = vmatpush.bf16.xpose.msra.mxu0 0
        %1571 = vmatpush.bf16.xpose.msra.mxu0 %v1562
        %1572 = vmatmul.bf16.gmra.mxu0 %v1559
        %v1573 = vpop.f32.mrf.mxu0
        %v1574 = vadd.f32 0.0, %v1573
        %v1575 = vpop.f32.mrf.mxu0
        %1576 = vdwg.mxu0
        %vm1577 = vcmask 64512
        %v1578 = vsel %vm1577, %v1441, -inf
        %1579 = vmax.xlane.f32.xlu0 %v1578
        %v1580 = vpop.xlane.xlu0 %1579
        %v1581 = vsel %vm1577, %v1460, -inf
        %1582 = vmax.xlane.f32.xlu0 %v1581
        %v1583 = vpop.xlane.xlu0 %1582
        %v1584 = vsel %vm1577, %v1479, -inf
        %1585 = vmax.xlane.f32.xlu0 %v1584
        %v1586 = vpop.xlane.xlu0 %1585
        %v1587 = vsel %vm1577, %v1498, -inf
        %1588 = vmax.xlane.f32.xlu0 %v1587
        %v1589 = vpop.xlane.xlu0 %1588
        %v1590 = vsel %vm1577, %v1517, -inf
        %1591 = vmax.xlane.f32.xlu0 %v1590
        %v1592 = vpop.xlane.xlu0 %1591
        %v1593 = vsel %vm1577, %v1536, -inf
        %1594 = vmax.xlane.f32.xlu0 %v1593
        %v1595 = vpop.xlane.xlu0 %1594
        %v1596 = vsel %vm1577, %v1555, -inf
        %1597 = vmax.xlane.f32.xlu0 %v1596
        %v1598 = vpop.xlane.xlu0 %1597
        %v1599 = vsel %vm1577, %v1574, -inf
        %1600 = vmax.xlane.f32.xlu0 %v1599
        %v1601 = vpop.xlane.xlu0 %1600
        %v1602 = vsub.f32 %v1441, %v1580
        %v1603 = vsub.f32 %v1460, %v1583
        %v1604 = vsub.f32 %v1479, %v1586
        %v1605 = vsub.f32 %v1498, %v1589
        %v1606 = vsub.f32 %v1517, %v1592
        %v1607 = vsub.f32 %v1536, %v1595
        %v1608 = vsub.f32 %v1555, %v1598
        %v1609 = vsub.f32 %v1574, %v1601
        %v1610 = vmul.f32 %v1602, 1.442695
        %v1611 = vpow.pop %v1610
        %v1612 = vmul.f32 %v1603, 1.442695
        %v1613 = vpow.pop %v1612
        %v1614 = vmul.f32 %v1604, 1.442695
        %v1615 = vpow.pop %v1614
        %v1616 = vmul.f32 %v1605, 1.442695
        %v1617 = vpow.pop %v1616
        %v1618 = vmul.f32 %v1606, 1.442695
        %v1619 = vpow.pop %v1618
        %v1620 = vmul.f32 %v1607, 1.442695
        %v1621 = vpow.pop %v1620
        %v1622 = vmul.f32 %v1608, 1.442695
        %v1623 = vpow.pop %v1622
        %v1624 = vmul.f32 %v1609, 1.442695
        %v1625 = vpow.pop %v1624
        %v1626 = vsel %vm1577, %v1611, 0.0
        %1627 = vadd.xlane.f32.xlu0 %v1626
        %v1628 = vpop.xlane.xlu0 %1627
        %v1629 = vsel %vm1577, %v1613, 0.0
        %1630 = vadd.xlane.f32.xlu0 %v1629
        %v1631 = vpop.xlane.xlu0 %1630
        %v1632 = vsel %vm1577, %v1615, 0.0
        %1633 = vadd.xlane.f32.xlu0 %v1632
        %v1634 = vpop.xlane.xlu0 %1633
        %v1635 = vsel %vm1577, %v1617, 0.0
        %1636 = vadd.xlane.f32.xlu0 %v1635
        %v1637 = vpop.xlane.xlu0 %1636
        %v1638 = vsel %vm1577, %v1619, 0.0
        %1639 = vadd.xlane.f32.xlu0 %v1638
        %v1640 = vpop.xlane.xlu0 %1639
        %v1641 = vsel %vm1577, %v1621, 0.0
        %1642 = vadd.xlane.f32.xlu0 %v1641
        %v1643 = vpop.xlane.xlu0 %1642
        %v1644 = vsel %vm1577, %v1623, 0.0
        %1645 = vadd.xlane.f32.xlu0 %v1644
        %v1646 = vpop.xlane.xlu0 %1645
        %v1647 = vsel %vm1577, %v1625, 0.0
        %1648 = vadd.xlane.f32.xlu0 %v1647
        %v1649 = vpop.xlane.xlu0 %1648
        %v1650 = vrcp.pop %v1628
        %v1651 = vrcp.pop %v1631
        %v1652 = vrcp.pop %v1634
        %v1653 = vrcp.pop %v1637
        %v1654 = vrcp.pop %v1640
        %v1655 = vrcp.pop %v1643
        %v1656 = vrcp.pop %v1646
        %v1657 = vrcp.pop %v1649
        %v1658 = vmul.f32 %v1611, %v1650
        %v1659 = vmul.f32 %v1613, %v1651
        %v1660 = vmul.f32 %v1615, %v1652
        %v1661 = vmul.f32 %v1617, %v1653
        %v1662 = vmul.f32 %v1619, %v1654
        %v1663 = vmul.f32 %v1621, %v1655
        %v1664 = vmul.f32 %v1623, %v1656
        %v1665 = vmul.f32 %v1625, %v1657
        %v1666 = vpack.c.bf16 %v1658, %v1658
        %v1667 = vpack.c.bf16 %v1659, %v1659
        %v1668 = vpack.c.bf16 %v1660, %v1660
        %v1669 = vpack.c.bf16 %v1661, %v1661
        %v1670 = vpack.c.bf16 %v1662, %v1662
        %v1671 = vpack.c.bf16 %v1663, %v1663
        %v1672 = vpack.c.bf16 %v1664, %v1664
        %v1673 = vpack.c.bf16 %v1665, %v1665
        %v1675 = vsel %vm1577, %v1666, 0
        %vm1677 = vcmask 1043456
        %v1679 = vsel %vm1677, %v1416, 0
        %1681 = vmatpush.bf16.msra.mxu0 0
        %1682 = vmatpush.bf16.msra.mxu0 0
        %1683 = vmatpush.bf16.msra.mxu0 0
        %1684 = vmatpush.bf16.msra.mxu0 0
        %1685 = vmatpush.bf16.msra.mxu0 0
        %1686 = vmatpush.bf16.msra.mxu0 0
        %1687 = vmatpush.bf16.msra.mxu0 0
        %1688 = vmatpush.bf16.msra.mxu0 %v1679
        %1689 = vmatmul.bf16.gmra.mxu0 %v1675
        %v1690 = vpop.f32.mrf.mxu0
        %v1691 = vadd.f32 0.0, %v1690
        %v1692 = vpop.f32.mrf.mxu0
        %1693 = vdwg.mxu0
        %v1695 = vsel %vm1577, %v1667, 0
        %v1698 = vsel %vm1677, %v1417, 0
        %1700 = vmatpush.bf16.msra.mxu0 0
        %1701 = vmatpush.bf16.msra.mxu0 0
        %1702 = vmatpush.bf16.msra.mxu0 0
        %1703 = vmatpush.bf16.msra.mxu0 0
        %1704 = vmatpush.bf16.msra.mxu0 0
        %1705 = vmatpush.bf16.msra.mxu0 0
        %1706 = vmatpush.bf16.msra.mxu0 0
        %1707 = vmatpush.bf16.msra.mxu0 %v1698
        %1708 = vmatmul.bf16.gmra.mxu0 %v1695
        %v1709 = vpop.f32.mrf.mxu0
        %v1710 = vadd.f32 0.0, %v1709
        %v1711 = vpop.f32.mrf.mxu0
        %1712 = vdwg.mxu0
        %v1714 = vsel %vm1577, %v1668, 0
        %v1717 = vsel %vm1677, %v1418, 0
        %1719 = vmatpush.bf16.msra.mxu0 0
        %1720 = vmatpush.bf16.msra.mxu0 0
        %1721 = vmatpush.bf16.msra.mxu0 0
        %1722 = vmatpush.bf16.msra.mxu0 0
        %1723 = vmatpush.bf16.msra.mxu0 0
        %1724 = vmatpush.bf16.msra.mxu0 0
        %1725 = vmatpush.bf16.msra.mxu0 0
        %1726 = vmatpush.bf16.msra.mxu0 %v1717
        %1727 = vmatmul.bf16.gmra.mxu0 %v1714
        %v1728 = vpop.f32.mrf.mxu0
        %v1729 = vadd.f32 0.0, %v1728
        %v1730 = vpop.f32.mrf.mxu0
        %1731 = vdwg.mxu0
        %v1733 = vsel %vm1577, %v1669, 0
        %v1736 = vsel %vm1677, %v1419, 0
        %1738 = vmatpush.bf16.msra.mxu0 0
        %1739 = vmatpush.bf16.msra.mxu0 0
        %1740 = vmatpush.bf16.msra.mxu0 0
        %1741 = vmatpush.bf16.msra.mxu0 0
        %1742 = vmatpush.bf16.msra.mxu0 0
        %1743 = vmatpush.bf16.msra.mxu0 0
        %1744 = vmatpush.bf16.msra.mxu0 0
        %1745 = vmatpush.bf16.msra.mxu0 %v1736
        %1746 = vmatmul.bf16.gmra.mxu0 %v1733
        %v1747 = vpop.f32.mrf.mxu0
        %v1748 = vadd.f32 0.0, %v1747
        %v1749 = vpop.f32.mrf.mxu0
        %1750 = vdwg.mxu0
        %v1752 = vsel %vm1577, %v1670, 0
        %v1755 = vsel %vm1677, %v1420, 0
        %1757 = vmatpush.bf16.msra.mxu0 0
        %1758 = vmatpush.bf16.msra.mxu0 0
        %1759 = vmatpush.bf16.msra.mxu0 0
        %1760 = vmatpush.bf16.msra.mxu0 0
        %1761 = vmatpush.bf16.msra.mxu0 0
        %1762 = vmatpush.bf16.msra.mxu0 0
        %1763 = vmatpush.bf16.msra.mxu0 0
        %1764 = vmatpush.bf16.msra.mxu0 %v1755
        %1765 = vmatmul.bf16.gmra.mxu0 %v1752
        %v1766 = vpop.f32.mrf.mxu0
        %v1767 = vadd.f32 0.0, %v1766
        %v1768 = vpop.f32.mrf.mxu0
        %1769 = vdwg.mxu0
        %v1771 = vsel %vm1577, %v1671, 0
        %v1774 = vsel %vm1677, %v1421, 0
        %1776 = vmatpush.bf16.msra.mxu0 0
        %1777 = vmatpush.bf16.msra.mxu0 0
        %1778 = vmatpush.bf16.msra.mxu0 0
        %1779 = vmatpush.bf16.msra.mxu0 0
        %1780 = vmatpush.bf16.msra.mxu0 0
        %1781 = vmatpush.bf16.msra.mxu0 0
        %1782 = vmatpush.bf16.msra.mxu0 0
        %1783 = vmatpush.bf16.msra.mxu0 %v1774
        %1784 = vmatmul.bf16.gmra.mxu0 %v1771
        %v1785 = vpop.f32.mrf.mxu0
        %v1786 = vadd.f32 0.0, %v1785
        %v1787 = vpop.f32.mrf.mxu0
        %1788 = vdwg.mxu0
        %v1790 = vsel %vm1577, %v1672, 0
        %v1793 = vsel %vm1677, %v1422, 0
        %1795 = vmatpush.bf16.msra.mxu0 0
        %1796 = vmatpush.bf16.msra.mxu0 0
        %1797 = vmatpush.bf16.msra.mxu0 0
        %1798 = vmatpush.bf16.msra.mxu0 0
        %1799 = vmatpush.bf16.msra.mxu0 0
        %1800 = vmatpush.bf16.msra.mxu0 0
        %1801 = vmatpush.bf16.msra.mxu0 0
        %1802 = vmatpush.bf16.msra.mxu0 %v1793
        %1803 = vmatmul.bf16.gmra.mxu0 %v1790
        %v1804 = vpop.f32.mrf.mxu0
        %v1805 = vadd.f32 0.0, %v1804
        %v1806 = vpop.f32.mrf.mxu0
        %1807 = vdwg.mxu0
        %v1809 = vsel %vm1577, %v1673, 0
        %v1812 = vsel %vm1677, %v1423, 0
        %1814 = vmatpush.bf16.msra.mxu0 0
        %1815 = vmatpush.bf16.msra.mxu0 0
        %1816 = vmatpush.bf16.msra.mxu0 0
        %1817 = vmatpush.bf16.msra.mxu0 0
        %1818 = vmatpush.bf16.msra.mxu0 0
        %1819 = vmatpush.bf16.msra.mxu0 0
        %1820 = vmatpush.bf16.msra.mxu0 0
        %1821 = vmatpush.bf16.msra.mxu0 %v1812
        %1822 = vmatmul.bf16.gmra.mxu0 %v1809
        %v1823 = vpop.f32.mrf.mxu0
        %v1824 = vadd.f32 0.0, %v1823
        %v1825 = vpop.f32.mrf.mxu0
        %1826 = vdwg.mxu0
        %v1827 = vrot.slane %v1729, 4
        %v1828 = vsel %vm684, %v1827, %v1691
        %v1829 = vrot.slane %v1691, 4
        %v1830 = vsel %vm684, %v1729, %v1829
        %v1832 = vunpack.c.l.s4 1983009808
        %v1833 = vunpack.c.0.s8 %v1832
        %v1834 = vperm.slane %v1828, %v1833
        %v1836 = vunpack.c.l.s4 1983009808
        %v1837 = vunpack.c.0.s8 %v1836
        %v1838 = vperm.slane %v1830, %v1837
        %v1839 = vrot.slane %v1748, 4
        %v1840 = vsel %vm684, %v1839, %v1710
        %v1841 = vrot.slane %v1710, 4
        %v1842 = vsel %vm684, %v1748, %v1841
        %v1844 = vunpack.c.l.s4 1983009808
        %v1845 = vunpack.c.0.s8 %v1844
        %v1846 = vperm.slane %v1840, %v1845
        %v1848 = vunpack.c.l.s4 1983009808
        %v1849 = vunpack.c.0.s8 %v1848
        %v1850 = vperm.slane %v1842, %v1849
        %v1851 = vrot.slane %v1805, 4
        %v1852 = vsel %vm684, %v1851, %v1767
        %v1853 = vrot.slane %v1767, 4
        %v1854 = vsel %vm684, %v1805, %v1853
        %v1856 = vunpack.c.l.s4 1983009808
        %v1857 = vunpack.c.0.s8 %v1856
        %v1858 = vperm.slane %v1852, %v1857
        %v1860 = vunpack.c.l.s4 1983009808
        %v1861 = vunpack.c.0.s8 %v1860
        %v1862 = vperm.slane %v1854, %v1861
        %v1863 = vrot.slane %v1824, 4
        %v1864 = vsel %vm684, %v1863, %v1786
        %v1865 = vrot.slane %v1786, 4
        %v1866 = vsel %vm684, %v1824, %v1865
        %v1868 = vunpack.c.l.s4 1983009808
        %v1869 = vunpack.c.0.s8 %v1868
        %v1870 = vperm.slane %v1864, %v1869
        %v1872 = vunpack.c.l.s4 1983009808
        %v1873 = vunpack.c.0.s8 %v1872
        %v1874 = vperm.slane %v1866, %v1873
        %v1875 = vrot.slane %v1846, 4
        %v1876 = vsel %vm684, %v1875, %v1834
        %v1877 = vrot.slane %v1834, 4
        %v1878 = vsel %vm684, %v1846, %v1877
        %v1880 = vunpack.c.l.s4 1934713408
        %v1881 = vunpack.c.0.s8 %v1880
        %v1882 = vperm.slane %v1876, %v1881
        %v1884 = vunpack.c.l.s4 1934713408
        %v1885 = vunpack.c.0.s8 %v1884
        %v1886 = vperm.slane %v1878, %v1885
        %v1887 = vrot.slane %v1850, 4
        %v1888 = vsel %vm684, %v1887, %v1838
        %v1889 = vrot.slane %v1838, 4
        %v1890 = vsel %vm684, %v1850, %v1889
        %v1892 = vunpack.c.l.s4 1934713408
        %v1893 = vunpack.c.0.s8 %v1892
        %v1894 = vperm.slane %v1888, %v1893
        %v1896 = vunpack.c.l.s4 1934713408
        %v1897 = vunpack.c.0.s8 %v1896
        %v1898 = vperm.slane %v1890, %v1897
        %v1899 = vrot.slane %v1870, 4
        %v1900 = vsel %vm684, %v1899, %v1858
        %v1901 = vrot.slane %v1858, 4
        %v1902 = vsel %vm684, %v1870, %v1901
        %v1904 = vunpack.c.l.s4 1934713408
        %v1905 = vunpack.c.0.s8 %v1904
        %v1906 = vperm.slane %v1900, %v1905
        %v1908 = vunpack.c.l.s4 1934713408
        %v1909 = vunpack.c.0.s8 %v1908
        %v1910 = vperm.slane %v1902, %v1909
        %v1911 = vrot.slane %v1874, 4
        %v1912 = vsel %vm684, %v1911, %v1862
        %v1913 = vrot.slane %v1862, 4
        %v1914 = vsel %vm684, %v1874, %v1913
        %v1916 = vunpack.c.l.s4 1934713408
        %v1917 = vunpack.c.0.s8 %v1916
        %v1918 = vperm.slane %v1912, %v1917
        %v1920 = vunpack.c.l.s4 1934713408
        %v1921 = vunpack.c.0.s8 %v1920
        %v1922 = vperm.slane %v1914, %v1921
        %v1923 = vrot.slane %v1906, 4
        %v1924 = vsel %vm684, %v1923, %v1882
        %v1925 = vrot.slane %v1882, 4
        %v1926 = vsel %vm684, %v1906, %v1925
        %v1927 = vrot.slane %v1910, 4
        %v1928 = vsel %vm684, %v1927, %v1886
        %v1929 = vrot.slane %v1886, 4
        %v1930 = vsel %vm684, %v1910, %v1929
        %v1931 = vrot.slane %v1918, 4
        %v1932 = vsel %vm684, %v1931, %v1894
        %v1933 = vrot.slane %v1894, 4
        %v1934 = vsel %vm684, %v1918, %v1933
        %v1935 = vrot.slane %v1922, 4
        %v1936 = vsel %vm684, %v1935, %v1898
        %v1937 = vrot.slane %v1898, 4
        %v1938 = vsel %vm684, %v1922, %v1937
        %v1939 = vrot.slane %v1928, 4
        %v1940 = vsel %vm684, %v1939, %v1924
        %v1941 = vrot.slane %v1924, 4
        %v1942 = vsel %vm684, %v1928, %v1941
        %v1944 = vunpack.c.l.s4 1983009808
        %v1945 = vunpack.c.0.s8 %v1944
        %v1946 = vperm.slane %v1940, %v1945
        %v1948 = vunpack.c.l.s4 1983009808
        %v1949 = vunpack.c.0.s8 %v1948
        %v1950 = vperm.slane %v1942, %v1949
        %v1951 = vrot.slane %v1930, 4
        %v1952 = vsel %vm684, %v1951, %v1926
        %v1953 = vrot.slane %v1926, 4
        %v1954 = vsel %vm684, %v1930, %v1953
        %v1956 = vunpack.c.l.s4 1983009808
        %v1957 = vunpack.c.0.s8 %v1956
        %v1958 = vperm.slane %v1952, %v1957
        %v1960 = vunpack.c.l.s4 1983009808
        %v1961 = vunpack.c.0.s8 %v1960
        %v1962 = vperm.slane %v1954, %v1961
        %v1963 = vrot.slane %v1936, 4
        %v1964 = vsel %vm684, %v1963, %v1932
        %v1965 = vrot.slane %v1932, 4
        %v1966 = vsel %vm684, %v1936, %v1965
        %v1968 = vunpack.c.l.s4 1983009808
        %v1969 = vunpack.c.0.s8 %v1968
        %v1970 = vperm.slane %v1964, %v1969
        %v1972 = vunpack.c.l.s4 1983009808
        %v1973 = vunpack.c.0.s8 %v1972
        %v1974 = vperm.slane %v1966, %v1973
        %v1975 = vrot.slane %v1938, 4
        %v1976 = vsel %vm684, %v1975, %v1934
        %v1977 = vrot.slane %v1934, 4
        %v1978 = vsel %vm684, %v1938, %v1977
        %v1980 = vunpack.c.l.s4 1983009808
        %v1981 = vunpack.c.0.s8 %v1980
        %v1982 = vperm.slane %v1976, %v1981
        %v1984 = vunpack.c.l.s4 1983009808
        %v1985 = vunpack.c.0.s8 %v1984
        %v1986 = vperm.slane %v1978, %v1985
        %v1987 = vrot.slane %v1958, 4
        %v1988 = vsel %vm684, %v1987, %v1946
        %v1989 = vrot.slane %v1946, 4
        %v1990 = vsel %vm684, %v1958, %v1989
        %v1992 = vunpack.c.l.s4 1934713408
        %v1993 = vunpack.c.0.s8 %v1992
        %v1994 = vperm.slane %v1988, %v1993
        %v1996 = vunpack.c.l.s4 1934713408
        %v1997 = vunpack.c.0.s8 %v1996
        %v1998 = vperm.slane %v1990, %v1997
        %v1999 = vrot.slane %v1962, 4
        %v2000 = vsel %vm684, %v1999, %v1950
        %v2001 = vrot.slane %v1950, 4
        %v2002 = vsel %vm684, %v1962, %v2001
        %v2004 = vunpack.c.l.s4 1934713408
        %v2005 = vunpack.c.0.s8 %v2004
        %v2006 = vperm.slane %v2000, %v2005
        %v2008 = vunpack.c.l.s4 1934713408
        %v2009 = vunpack.c.0.s8 %v2008
        %v2010 = vperm.slane %v2002, %v2009
        %v2011 = vrot.slane %v1982, 4
        %v2012 = vsel %vm684, %v2011, %v1970
        %v2013 = vrot.slane %v1970, 4
        %v2014 = vsel %vm684, %v1982, %v2013
        %v2016 = vunpack.c.l.s4 1934713408
        %v2017 = vunpack.c.0.s8 %v2016
        %v2018 = vperm.slane %v2012, %v2017
        %v2020 = vunpack.c.l.s4 1934713408
        %v2021 = vunpack.c.0.s8 %v2020
        %v2022 = vperm.slane %v2014, %v2021
        %v2023 = vrot.slane %v1986, 4
        %v2024 = vsel %vm684, %v2023, %v1974
        %v2025 = vrot.slane %v1974, 4
        %v2026 = vsel %vm684, %v1986, %v2025
        %v2028 = vunpack.c.l.s4 1934713408
        %v2029 = vunpack.c.0.s8 %v2028
        %v2030 = vperm.slane %v2024, %v2029
        %v2032 = vunpack.c.l.s4 1934713408
        %v2033 = vunpack.c.0.s8 %v2032
        %v2034 = vperm.slane %v2026, %v2033
        %v2035 = vrot.slane %v2018, 4
        %v2036 = vsel %vm684, %v2035, %v1994
        %v2037 = vrot.slane %v1994, 4
        %v2038 = vsel %vm684, %v2018, %v2037
        %v2039 = vrot.slane %v2022, 4
        %v2040 = vsel %vm684, %v2039, %v1998
        %v2041 = vrot.slane %v1998, 4
        %v2042 = vsel %vm684, %v2022, %v2041
        %v2043 = vrot.slane %v2030, 4
        %v2044 = vsel %vm684, %v2043, %v2006
        %v2045 = vrot.slane %v2006, 4
        %v2046 = vsel %vm684, %v2030, %v2045
        %v2047 = vrot.slane %v2034, 4
        %v2048 = vsel %vm684, %v2047, %v2010
        %v2049 = vrot.slane %v2010, 4
        %v2050 = vsel %vm684, %v2034, %v2049
        %2052 = vrot.lane.b32.xlu0 %v2038, 4
        %v2053 = vpop.permute.xlu0 %2052
        %2056 = vrot.lane.b32.xlu0 %v2040, 8
        %v2057 = vpop.permute.xlu0 %2056
        %2060 = vrot.lane.b32.xlu0 %v2042, 12
        %v2061 = vpop.permute.xlu0 %2060
        %2064 = vrot.lane.b32.xlu0 %v2044, 16
        %v2065 = vpop.permute.xlu0 %2064
        %2068 = vrot.lane.b32.xlu0 %v2046, 20
        %v2069 = vpop.permute.xlu0 %2068
        %2072 = vrot.lane.b32.xlu0 %v2048, 24
        %v2073 = vpop.permute.xlu0 %2072
        %2076 = vrot.lane.b32.xlu0 %v2050, 28
        %v2077 = vpop.permute.xlu0 %2076
        %v2079 = vsel %vm1424, %v2036, %v2053
        %v2080 = vsel %vm1577, %v2079, %v2057
        %vm2081 = vcmask 97280
        %v2082 = vsel %vm2081, %v2080, %v2061
        %vm2083 = vcmask 130048
        %v2084 = vsel %vm2083, %v2082, %v2065
        %vm2085 = vcmask 162816
        %v2086 = vsel %vm2085, %v2084, %v2069
        %vm2087 = vcmask 195584
        %v2088 = vsel %vm2087, %v2086, %v2073
        %vm2089 = vcmask 228352
        %v2090 = vsel %vm2089, %v2088, %v2077
        %v2091 = vpack.c.bf16 %v2090, %v2090
        %v2092 = vld [vmem:[#allocation13] sm:$0xf]
        %v2093 = vld [vmem:[#allocation13 + $0x4] sm:$0xf]
        %v2094 = vld [vmem:[#allocation13 + $0x8] sm:$0xf]
        %v2095 = vld [vmem:[#allocation13 + $0xc] sm:$0xf]
        %v2096 = vld [vmem:[%s10] sm:$0x1]
        %v2098 = vperm.slane %v2096, 0
        %v2104 = vunpack.c.l.b16 %v2092
        %v2105 = vunpack.c.l.b16 %v2093
        %v2106 = vunpack.c.l.b16 %v2094
        %v2107 = vunpack.c.l.b16 %v2095
        %v2108 = vpack.c.b16 %v2105, %v2104
        %v2109 = vpack.c.b16 %v2107, %v2106
        %v2113 = vsel %vm572, %v2091, 0
        %2115 = vmatpush.bf16.msra.mxu0 0
        %2116 = vmatpush.bf16.msra.mxu0 0
        %2117 = vmatpush.bf16.msra.mxu0 0
        %2118 = vmatpush.bf16.msra.mxu0 0
        %2119 = vmatpush.bf16.msra.mxu0 0
        %2120 = vmatpush.bf16.msra.mxu0 0
        %2121 = vmatpush.bf16.msra.mxu0 %v2109
        %2122 = vmatpush.bf16.msra.mxu0 %v2108
        %2123 = vmatmul.bf16.gmra.mxu0 %v2113
        %v2124 = vpop.f32.mrf.mxu0
        %v2125 = vadd.f32 %v2098, %v2124
        %v2126 = vpop.f32.mrf.mxu0
        %2127 = vdwg.mxu0
        %2128 = vst.msk [vmem:[%s544] sm:$0xff] %vm572, %v2125
        %s2129 = sand.u32 %s287, 1
        %s2130 = scalar_lea.sflag [#allocation4], %s2129
        %s2131 = sand.u32 %s287, 1
        %s2132 = smul.addr %s2131, 8
        %s2133 = scalar_lea.vmem [#allocation14], %s2132
        // Predicated region
        $region93: #{tpu_custom_call.1} parent=63 // pred_check
          %p2134 = pneg %p297
        $region94: #{tpu_custom_call.1} parent=63 // pred_check_branch
          %2136 = sbr.rel (%p2134) target = $region96
        $region95: #{tpu_custom_call.1} parent=63 // pred_region
          %2138 = vsyncadd %s2130, 0
          %s2139 = smul.addr %s33, 8
          %s2140 = scalar_lea.hbm %s11, %s2139
          %s2142 = sshll.u32 %s2133, 4
          %s2143 = int_to_ptr.vmem [resolvable:$true] %s2142
          %s2144 = sshll.u32 %s2140, 4
          %s2145 = int_to_ptr.hbm [resolvable:$true] %s2144
          %2147 = dma.vmem_to_hbm [thread:$0]  %s2143, 128, %s2145, %s2130
        $region96: #{tpu_custom_call.1} parent=63 // pred_fallthru
          _
      $region64: #{tpu_custom_call.1} parent=5 // pred_fallthru
        _
      %p2148 = scmp.le.s32.totalorder 2, %s28
      // Predicated region
      $region97: #{tpu_custom_call.1} parent=5 // pred_check
        %p2149 = pneg %p2148
      $region98: #{tpu_custom_call.1} parent=5 // pred_check_branch
        %2151 = sbr.rel (%p2149) target = $region100
      $region99: #{tpu_custom_call.1} parent=5 // pred_region
        %s2152 = ssub.s32 %s28, 2
        // Predicated region
        $region101: #{tpu_custom_call.1} parent=99 // pred_check
          %p2153 = pneg %p303
        $region102: #{tpu_custom_call.1} parent=99 // pred_check_branch
          %2155 = sbr.rel (%p2153) target = $region104
        $region103: #{tpu_custom_call.1} parent=99 // pred_region
          %s2156 = sand.u32 %s288, 1
          %s2157 = scalar_lea.sflag [#allocation4], %s2156
          %s2158 = sand.u32 %s288, 1
          %s2159 = smul.addr %s2158, 8
          %s2160 = scalar_lea.vmem [#allocation14], %s2159
          %2162 = dma.done %s2157, 128
        $region104: #{tpu_custom_call.1} parent=99 // pred_fallthru
          _
      $region100: #{tpu_custom_call.1} parent=5 // pred_fallthru
        _
    $region6: #{tpu_custom_call.1} parent=1 // loop_footer
      %s32 = sadd.s32 1, %s28
    $region7: #{tpu_custom_call.1} parent=1 // loop_footer_branch
      %27 = sbr.rel target = $region3
    $region8: #{tpu_custom_call.1} parent=1 // loop_exit
      _
    %2163 = vsyncpa [#allocation3], 1
    %s2164 = scalar_lea.sflag [#allocation3], 1
    %2165 = vsyncpa %s2164, 1
    %2166 = vsyncpa [#allocation6], 1
    %s2167 = scalar_lea.sflag [#allocation6], 1
    %2168 = vsyncpa %s2167, 1
    %2169 = vsyncpa [#allocation9], 1
    %2170 = vsyncpa [#allocation12], 1
    %2171 = vsyncpa [#allocation4], 1
    %s2172 = scalar_lea.sflag [#allocation4], 1
    %2173 = vsyncpa %s2172, 1

</llo_original>
